<compile_context>
chip_gen: v6e
topology: v6e:2x2x1
jax: 0.10.0
libtpu: 0.0.40
codegen_flags: <defaults>
</compile_context>

<pallas_src>
import math
import functools

import jax
import jax.numpy as jnp
from jax.experimental import pallas as pl
from jax.experimental.pallas import tpu as pltpu


# ---------------------------------------------------------------------------
# Fused kernel: whole batch in one invocation, everything VMEM-resident.
# ---------------------------------------------------------------------------

def _raindrop_fused_kernel(
        # data
        src_ref, times_ref, static_ref, lens_ref,
        # prologue / static-embedding weights
        wru_ref, invts_ref, embw_ref, embb_ref,
        # stacked encoder-layer weights (leading axis = nlayers)
        wqkv_ref, wo_ref, w1_ref, w2_ref, vec_ref,
        # outputs
        agg_ref, emb_ref,
        *, nhead, K, nts, eps=1e-5):
    f32 = jnp.float32
    bf16 = jnp.bfloat16

    BT = src_ref.shape[0]
    B = lens_ref.shape[0]
    T = BT // B
    nlayers, D, _ = wo_ref.shape
    Dh = D // nhead
    nhid = w1_ref.shape[2]
    H3 = 3 * nhead * Dh

    # ---- prologue: relu(repeat_interleave(src, d_ob) * R_u) as one folded,
    #      zero-padded matmul (lanes K..D-1 of W are zero -> relu -> 0).
    h = jnp.maximum(
        jnp.dot(src_ref[...].astype(bf16), wru_ref[...],
                preferred_element_type=f32), 0.0)                       # (BT, D)

    # ---- positional encoding without concat: inv_ts is stored duplicated and
    #      zero-padded to width D; select sin/cos/zero by lane index.
    scaled = times_ref[...] * invts_ref[...]                            # (BT, D)
    lane = jax.lax.broadcasted_iota(jnp.int32, (1, D), 1)
    pe = jnp.where(lane < K, 0.0,
                   jnp.where(lane < K + nts, jnp.sin(scaled), jnp.cos(scaled)))
    x = h + pe                                                          # (BT, D) f32

    # ---- masks built in-kernel (arange(maxlen) >= lengths).  NOTE: a fully
    #      padded row degenerates to uniform attention instead of PyTorch's NaN
    #      rows, but those rows are zeroed by the masked mean anyway.
    lens = lens_ref[...]                                                # (B, 1) f32
    kpos = jax.lax.broadcasted_iota(jnp.int32, (B, T, T), 2).astype(f32)
    neg = jnp.where(kpos >= lens[:, :, None], -1e9, 0.0)                # (B, T, T)
    qpos = jax.lax.broadcasted_iota(jnp.int32, (B, T, D), 1).astype(f32)
    keep = (qpos < lens[:, :, None]).astype(f32)                        # (B, T, D)

    # ---- TransformerEncoder stack (post-norm, ReLU FFN), fully unrolled ----
    for l in range(nlayers):
        vec = vec_ref[l]                           # (8, H3) packed small vectors
        xb = x.astype(bf16)

        # merged Q/K/V projection (1/sqrt(Dh) pre-folded into the Q columns)
        qkv = jnp.dot(xb, wqkv_ref[l], preferred_element_type=f32) + vec[0:1, :]
        qkv3 = qkv.reshape(B, T, H3)

        ctx_heads = []
        for hh in range(nhead):                    # static unroll (nhead small)
            qo, ko, vo = hh * Dh, (nhead + hh) * Dh, (2 * nhead + hh) * Dh
            qh = qkv3[:, :, qo:qo + Dh].astype(bf16)
            kh = qkv3[:, :, ko:ko + Dh].astype(bf16)
            vh = qkv3[:, :, vo:vo + Dh].astype(bf16)
            s = jnp.einsum('bqd,bkd->bqk', qh, kh,
                           preferred_element_type=f32) + neg            # (B,T,T)
            s = s - jnp.max(s, axis=-1, keepdims=True)
            p = jnp.exp(s)
            p = p * pl.reciprocal(jnp.sum(p, axis=-1, keepdims=True), approx=True)
            ctx_heads.append(jnp.einsum('bqk,bkd->bqd', p.astype(bf16), vh,
                                        preferred_element_type=f32))    # (B,T,Dh)
        ctx = jnp.concatenate(ctx_heads, axis=-1).reshape(BT, D)
        attn = jnp.dot(ctx.astype(bf16), wo_ref[l],
                       preferred_element_type=f32) + vec[1:2, :D]

        # post-norm 1 (one-pass statistics: mu and E[y^2] are independent)
        y = x + attn
        mu = jnp.mean(y, axis=-1, keepdims=True)
        msq = jnp.mean(y * y, axis=-1, keepdims=True)
        y = (y - mu) * jax.lax.rsqrt(msq - mu * mu + eps) * vec[2:3, :D] + vec[3:4, :D]

        # feed-forward (ReLU)
        hid = jnp.maximum(
            jnp.dot(y.astype(bf16), w1_ref[l], preferred_element_type=f32)
            + vec[4:5, :nhid], 0.0)
        ff = jnp.dot(hid.astype(bf16), w2_ref[l],
                     preferred_element_type=f32) + vec[5:6, :D]

        # post-norm 2
        z = y + ff
        mu2 = jnp.mean(z, axis=-1, keepdims=True)
        msq2 = jnp.mean(z * z, axis=-1, keepdims=True)
        x = (z - mu2) * jax.lax.rsqrt(msq2 - mu2 * mu2 + eps) * vec[6:7, :D] + vec[7:8, :D]

    # ---- epilogue 1: masked mean over time (sum / (length + 1), as in the ref)
    x3 = x.reshape(B, T, D)
    agg_ref[...] = jnp.sum(x3 * keep, axis=1) / (lens + 1.0)            # (B, D)

    # ---- epilogue 2: static embedding Linear done on the VPU (d_static MACs)
    st = static_ref[...]                                                # (B, d_static)
    ew = embw_ref[...]                                                  # (d_static, d_inp)
    emb = jnp.zeros((B, ew.shape[1]), f32) + embb_ref[...]
    for k in range(st.shape[1]):
        emb = emb + st[:, k:k + 1] * ew[k:k + 1, :]
    emb_ref[...] = emb                                                  # (B, d_inp)


# ---------------------------------------------------------------------------
# pallas_call plumbing (single grid step, all operands fully VMEM-resident)
# ---------------------------------------------------------------------------

def raindrop_fused(src2, times2, static_b, lens2, params, *, nhead, K, nts):
    B = lens2.shape[0]
    nlayers, D, _ = params['wo'].shape
    d_emb = params['emb_w'].shape[1]

    args = [src2, times2, static_b, lens2,
            params['w_ru'], params['inv_ts'], params['emb_w'], params['emb_b'],
            params['wqkv'], params['wo'], params['w1'], params['w2'], params['vecs']]

    def full_spec(a):
        nd = a.ndim
        return pl.BlockSpec(a.shape, lambda i, _nd=nd: (0,) * _nd)

    kern = functools.partial(_raindrop_fused_kernel, nhead=nhead, K=K, nts=nts)

    agg, emb = pl.pallas_call(
        kern,
        grid=(1,),
        in_specs=[full_spec(a) for a in args],
        out_specs=(pl.BlockSpec((B, D), lambda i: (0, 0)),
                   pl.BlockSpec((B, d_emb), lambda i: (0, 0))),
        out_shape=(jax.ShapeDtypeStruct((B, D), jnp.float32),
                   jax.ShapeDtypeStruct((B, d_emb), jnp.float32)),
        compiler_params=pltpu.CompilerParams(
            dimension_semantics=("arbitrary",)),
    )(*args)
    return agg, emb


# ---------------------------------------------------------------------------
# Parameters (deterministic synthetic init; kernel-friendly layout: weights
# pre-transposed to (Kin, N), merged QKV with the attention scale folded in,
# zero-padded prologue weights, small per-layer vectors packed into one array)
# ---------------------------------------------------------------------------

def init_params(key, d_inp, d_ob, d_static, nhead, nhid, nlayers, max_len, d_pe=16):
    K = d_inp * d_ob
    nts = d_pe // 2
    D = K + d_pe
    assert D % nhead == 0
    Dh = D // nhead
    H3 = 3 * nhead * Dh
    assert H3 >= D and H3 >= nhid
    ks = jax.random.split(key, 11)

    # R_u (glorot) folded with the repeat_interleave selection matrix, then
    # zero-padded to width D so that x = relu(src @ w_ru) + pe  (no lane concat).
    glorot = math.sqrt(6.0 / (1 + K))
    r_u = jax.random.uniform(ks[0], (1, K), jnp.float32, -glorot, glorot)
    rep = jnp.repeat(jnp.eye(d_inp, dtype=jnp.float32), d_ob, axis=1)     # (d_inp, K)
    w_ru = jnp.zeros((d_inp, D), jnp.float32).at[:, :K].set(rep * r_u)
    w_ru = w_ru.astype(jnp.bfloat16)

    # positional-encoder inverse timescales, duplicated (sin / cos halves) and
    # zero-padded to width D.
    timescales = jnp.power(jnp.float32(max_len), jnp.linspace(0.0, 1.0, nts))
    inv = (1.0 / timescales).astype(jnp.float32)
    inv_ts = jnp.concatenate([jnp.zeros((K,), jnp.float32), inv, inv]).reshape(1, D)

    # static embedding Linear(d_static, d_inp): weight uniform(-1e-10, 1e-10)
    emb_w = jax.random.uniform(ks[1], (d_static, d_inp), jnp.float32, -1e-10, 1e-10)
    bnd = 1.0 / math.sqrt(d_static)
    emb_b = jax.random.uniform(ks[2], (1, d_inp), jnp.float32, -bnd, bnd)

    sc = 1.0 / math.sqrt(D)
    sc2 = 1.0 / math.sqrt(nhid)
    u = lambda k, shape, lo, hi: jax.random.uniform(k, shape, jnp.float32, lo, hi)

    # merged QKV weight; 1/sqrt(Dh) attention scale folded into the Q columns.
    wq = u(ks[3], (nlayers, D, nhead * Dh), -sc, sc) * (1.0 / math.sqrt(Dh))
    wk = u(ks[4], (nlayers, D, nhead * Dh), -sc, sc)
    wv = u(ks[5], (nlayers, D, nhead * Dh), -sc, sc)
    wqkv = jnp.concatenate([wq, wk, wv], axis=-1).astype(jnp.bfloat16)   # (L, D, 3*D)

    wo = u(ks[6], (nlayers, D, D), -sc, sc).astype(jnp.bfloat16)
    w1 = u(ks[7], (nlayers, D, nhid), -sc, sc).astype(jnp.bfloat16)
    w2 = u(ks[8], (nlayers, nhid, D), -sc2, sc2).astype(jnp.bfloat16)

    # packed per-layer small f32 vectors (row layout documented in the kernel):
    #   0: QKV bias (zeros, as in nn.MultiheadAttention init; Q part pre-scaled)
    #   1: out-proj bias (zeros)   2/3: LN1 weight/bias
    #   4: FFN bias1               5: FFN bias2          6/7: LN2 weight/bias
    vecs = jnp.zeros((nlayers, 8, H3), jnp.float32)
    vecs = vecs.at[:, 2, :D].set(1.0)
    vecs = vecs.at[:, 6, :D].set(1.0)
    vecs = vecs.at[:, 4, :nhid].set(u(ks[9], (nlayers, nhid), -sc, sc))
    vecs = vecs.at[:, 5, :D].set(u(ks[10], (nlayers, D), -sc2, sc2))

    return dict(w_ru=w_ru, inv_ts=inv_ts, emb_w=emb_w, emb_b=emb_b,
                wqkv=wqkv, wo=wo, w1=w1, w2=w2, vecs=vecs)


# ---------------------------------------------------------------------------
# Raindrop_v2 forward (eval mode: dropout == identity, sensor_wise_mask=False)
# ---------------------------------------------------------------------------

def raindrop_forward(params, src, static, times, lengths,
                     *, d_inp, d_ob, nhead, d_pe=16):
    T, B, _ = src.shape
    src_vals = src[:, :, :d_inp].astype(jnp.float32)
    # missing_mask = src[:, :, d_inp:] is unused on the sensor_wise_mask=False path.

    # tiny batch-major glue reshapes (everything else happens inside the kernel)
    src2 = jnp.transpose(src_vals, (1, 0, 2)).reshape(B * T, d_inp)      # (B*T, d_inp)
    times2 = jnp.transpose(times.astype(jnp.float32)).reshape(B * T, 1)  # (B*T, 1)
    static_b = static.astype(jnp.float32)                                # (B, d_static)
    lens2 = lengths.astype(jnp.float32).reshape(B, 1)                    # (B, 1)

    agg, emb = raindrop_fused(src2, times2, static_b, lens2, params,
                              nhead=nhead, K=d_inp * d_ob, nts=d_pe // 2)
    out = jnp.concatenate([agg, emb], axis=1)                            # (B, D+d_inp)

    # TODO(synk): `Observation_progation` source not provided — graph message passing
    # is an identity pass-through; with the all-ones global structure every alpha_all
    # column is identical, so cdist(...).mean() == 0 exactly and is constant-folded.
    distance = jnp.float32(0.0)
    return out, distance, None


# ---------------------------------------------------------------------------
# Demo
# ---------------------------------------------------------------------------

if __name__ == "__main__":
    # small config consistent with the module
    d_inp, d_model, nhead, nhid, nlayers = 4, 8, 2, 16, 2
    d_static = 3
    T, B = 8, 2
    max_len = T
    d_ob = max(int(d_model / d_inp), 2)       # = 2 -> transformer width 8 + 16 = 24

    key = jax.random.PRNGKey(0)
    k_src, k_mask, k_static, k_param = jax.random.split(key, 4)

    src_vals = jax.random.normal(k_src, (T, B, d_inp), jnp.float32)
    miss = (jax.random.uniform(k_mask, (T, B, d_inp)) > 0.5).astype(jnp.float32)
    src = jnp.concatenate([src_vals, miss], axis=-1)               # (T, B, 2*d_inp)
    times = jnp.broadcast_to(
        jnp.arange(1, T + 1, dtype=jnp.float32)[:, None], (T, B))
    static = jax.random.normal(k_static, (B, d_static), jnp.float32)
    lengths = jnp.array([5.0, 8.0], jnp.float32)

    params = init_params(k_param, d_inp, d_ob, d_static, nhead, nhid, nlayers, max_len)

    fwd = jax.jit(functools.partial(raindrop_forward, d_inp=d_inp, d_ob=d_ob,
                                    nhead=nhead, d_pe=16))
    out, distance, _ = fwd(params, src, static, times, lengths)
    jax.block_until_ready((out, distance))
    assert out.shape == (B, d_inp * d_ob + 16 + d_inp)
    print("KERNEL_OK")
</pallas_src>

<mosaic_0001>
module attributes {stable_mosaic.version = 11 : i64} {
  func.func @_raindrop_fused_kernel(%arg0: i32, %arg1: memref<16x4xf32, #tpu.memory_space<vmem>>, %arg2: memref<16x1xf32, #tpu.memory_space<vmem>>, %arg3: memref<2x3xf32, #tpu.memory_space<vmem>>, %arg4: memref<2x1xf32, #tpu.memory_space<vmem>>, %arg5: memref<4x24xbf16, #tpu.memory_space<vmem>>, %arg6: memref<1x24xf32, #tpu.memory_space<vmem>>, %arg7: memref<3x4xf32, #tpu.memory_space<vmem>>, %arg8: memref<1x4xf32, #tpu.memory_space<vmem>>, %arg9: memref<2x24x72xbf16, #tpu.memory_space<vmem>>, %arg10: memref<2x24x24xbf16, #tpu.memory_space<vmem>>, %arg11: memref<2x24x16xbf16, #tpu.memory_space<vmem>>, %arg12: memref<2x16x24xbf16, #tpu.memory_space<vmem>>, %arg13: memref<2x8x72xf32, #tpu.memory_space<vmem>>, %arg14: memref<2x24xf32, #tpu.memory_space<vmem>>, %arg15: memref<2x4xf32, #tpu.memory_space<vmem>>) attributes {dimension_semantics = [#tpu.dimension_semantics<arbitrary>], iteration_bounds = array<i64: 1>, scalar_prefetch = 0 : i64, scratch_operands = 0 : i64, tpu.core_type = #tpu.core_type<tc>, window_params = [{pipeline_mode = #tpu.pipeline_mode<synchronous>, transform_indices = @transform_0, window_bounds = array<i64: 16, 4>}, {pipeline_mode = #tpu.pipeline_mode<synchronous>, transform_indices = @transform_1, window_bounds = array<i64: 16, 1>}, {pipeline_mode = #tpu.pipeline_mode<synchronous>, transform_indices = @transform_2, window_bounds = array<i64: 2, 3>}, {pipeline_mode = #tpu.pipeline_mode<synchronous>, transform_indices = @transform_3, window_bounds = array<i64: 2, 1>}, {pipeline_mode = #tpu.pipeline_mode<synchronous>, transform_indices = @transform_4, window_bounds = array<i64: 4, 24>}, {pipeline_mode = #tpu.pipeline_mode<synchronous>, transform_indices = @transform_5, window_bounds = array<i64: 1, 24>}, {pipeline_mode = #tpu.pipeline_mode<synchronous>, transform_indices = @transform_6, window_bounds = array<i64: 3, 4>}, {pipeline_mode = #tpu.pipeline_mode<synchronous>, transform_indices = @transform_7, window_bounds = array<i64: 1, 4>}, {pipeline_mode = #tpu.pipeline_mode<synchronous>, transform_indices = @transform_8, window_bounds = array<i64: 2, 24, 72>}, {pipeline_mode = #tpu.pipeline_mode<synchronous>, transform_indices = @transform_9, window_bounds = array<i64: 2, 24, 24>}, {pipeline_mode = #tpu.pipeline_mode<synchronous>, transform_indices = @transform_10, window_bounds = array<i64: 2, 24, 16>}, {pipeline_mode = #tpu.pipeline_mode<synchronous>, transform_indices = @transform_11, window_bounds = array<i64: 2, 16, 24>}, {pipeline_mode = #tpu.pipeline_mode<synchronous>, transform_indices = @transform_12, window_bounds = array<i64: 2, 8, 72>}, {pipeline_mode = #tpu.pipeline_mode<synchronous>, transform_indices = @transform_13, window_bounds = array<i64: 2, 24>}, {pipeline_mode = #tpu.pipeline_mode<synchronous>, transform_indices = @transform_14, window_bounds = array<i64: 2, 4>}]} {
    %c0 = arith.constant 0 : index
    %c0_0 = arith.constant 0 : index
    %0 = vector.load %arg1[%c0, %c0_0] : memref<16x4xf32, #tpu.memory_space<vmem>>, vector<16x4xf32>
    %1 = arith.truncf %0 : vector<16x4xf32> to vector<16x4xbf16>
    %c0_1 = arith.constant 0 : index
    %c0_2 = arith.constant 0 : index
    %2 = vector.load %arg5[%c0_1, %c0_2] : memref<4x24xbf16, #tpu.memory_space<vmem>>, vector<4x24xbf16>
    %cst = arith.constant dense<0.000000e+00> : vector<16x24xf32>
    %3 = tpu.matmul %1, %2, %cst {dimension_numbers = #tpu.dot_dimension_numbers<[1], [0], [0], [1], [0, 0, 1, 1], [], []>} : vector<16x4xbf16>, vector<4x24xbf16>, vector<16x24xf32> -> vector<16x24xf32>
    %cst_3 = arith.constant 0.000000e+00 : f32
    %4 = vector.broadcast %cst_3 : f32 to vector<16x24xf32>
    %5 = arith.maximumf %3, %4 : vector<16x24xf32>
    %c0_4 = arith.constant 0 : index
    %c0_5 = arith.constant 0 : index
    %6 = vector.load %arg2[%c0_4, %c0_5] : memref<16x1xf32, #tpu.memory_space<vmem>>, vector<16x1xf32>
    %c0_6 = arith.constant 0 : index
    %c0_7 = arith.constant 0 : index
    %7 = vector.load %arg6[%c0_6, %c0_7] : memref<1x24xf32, #tpu.memory_space<vmem>>, vector<1x24xf32>
    %8 = vector.broadcast %6 : vector<16x1xf32> to vector<16x24xf32>
    %9 = vector.broadcast %7 : vector<1x24xf32> to vector<16x24xf32>
    %10 = arith.mulf %8, %9 : vector<16x24xf32>
    %11 = tpu.iota {dimensions = array<i32: 1>} : vector<1x24xi32>
    %c8_i32 = arith.constant 8 : i32
    %12 = vector.broadcast %c8_i32 : i32 to vector<1x24xi32>
    %13 = arith.cmpi slt, %11, %12 : vector<1x24xi32>
    %c16_i32 = arith.constant 16 : i32
    %14 = vector.broadcast %c16_i32 : i32 to vector<1x24xi32>
    %15 = arith.cmpi slt, %11, %14 : vector<1x24xi32>
    %16 = math.sin %10 : vector<16x24xf32>
    %17 = math.cos %10 : vector<16x24xf32>
    %18 = vector.shape_cast %15 : vector<1x24xi1> to vector<1x24xi1>
    %19 = vector.broadcast %18 : vector<1x24xi1> to vector<16x24xi1>
    %20 = arith.select %19, %16, %17 : vector<16x24xi1>, vector<16x24xf32>
    %cst_8 = arith.constant 0.000000e+00 : f32
    %21 = vector.shape_cast %13 : vector<1x24xi1> to vector<1x24xi1>
    %22 = vector.broadcast %21 : vector<1x24xi1> to vector<16x24xi1>
    %23 = vector.broadcast %cst_8 : f32 to vector<16x24xf32>
    %24 = arith.select %22, %23, %20 : vector<16x24xi1>, vector<16x24xf32>
    %25 = arith.addf %5, %24 : vector<16x24xf32>
    %c0_9 = arith.constant 0 : index
    %c0_10 = arith.constant 0 : index
    %26 = vector.load %arg4[%c0_9, %c0_10] : memref<2x1xf32, #tpu.memory_space<vmem>>, vector<2x1xf32>
    %27 = tpu.iota {dimensions = array<i32: 2>} : vector<2x8x8xi32>
    %28 = arith.sitofp %27 : vector<2x8x8xi32> to vector<2x8x8xf32>
    %29 = vector.shape_cast %26 : vector<2x1xf32> to vector<2x1x1xf32>
    %30 = vector.broadcast %29 : vector<2x1x1xf32> to vector<2x8x8xf32>
    %31 = arith.cmpf oge, %28, %30 : vector<2x8x8xf32>
    %cst_11 = arith.constant -1.000000e+09 : f32
    %cst_12 = arith.constant 0.000000e+00 : f32
    %32 = vector.broadcast %cst_11 : f32 to vector<2x8x8xf32>
    %33 = vector.broadcast %cst_12 : f32 to vector<2x8x8xf32>
    %34 = arith.select %31, %32, %33 : vector<2x8x8xi1>, vector<2x8x8xf32>
    %35 = tpu.iota {dimensions = array<i32: 1>} : vector<2x8x24xi32>
    %36 = arith.sitofp %35 : vector<2x8x24xi32> to vector<2x8x24xf32>
    %37 = vector.shape_cast %26 : vector<2x1xf32> to vector<2x1x1xf32>
    %38 = vector.broadcast %37 : vector<2x1x1xf32> to vector<2x8x24xf32>
    %39 = arith.cmpf olt, %36, %38 : vector<2x8x24xf32>
    %40 = arith.extui %39 : vector<2x8x24xi1> to vector<2x8x24xi32>
    %41 = arith.sitofp %40 : vector<2x8x24xi32> to vector<2x8x24xf32>
    %c0_13 = arith.constant 0 : index
    %c0_14 = arith.constant 0 : index
    %c0_15 = arith.constant 0 : index
    %42 = vector.load %arg13[%c0_13, %c0_14, %c0_15] : memref<2x8x72xf32, #tpu.memory_space<vmem>>, vector<1x8x72xf32>
    %43 = vector.shape_cast %42 : vector<1x8x72xf32> to vector<8x72xf32>
    %44 = arith.truncf %25 : vector<16x24xf32> to vector<16x24xbf16>
    %c0_16 = arith.constant 0 : index
    %c0_17 = arith.constant 0 : index
    %c0_18 = arith.constant 0 : index
    %45 = vector.load %arg9[%c0_16, %c0_17, %c0_18] : memref<2x24x72xbf16, #tpu.memory_space<vmem>>, vector<1x24x72xbf16>
    %46 = vector.shape_cast %45 : vector<1x24x72xbf16> to vector<24x72xbf16>
    %cst_19 = arith.constant dense<0.000000e+00> : vector<16x72xf32>
    %47 = tpu.matmul %44, %46, %cst_19 {dimension_numbers = #tpu.dot_dimension_numbers<[1], [0], [0], [1], [0, 0, 1, 1], [], []>} : vector<16x24xbf16>, vector<24x72xbf16>, vector<16x72xf32> -> vector<16x72xf32>
    %48 = vector.extract_strided_slice %43 {offsets = [0, 0], sizes = [1, 72], strides = [1, 1]} : vector<8x72xf32> to vector<1x72xf32>
    %49 = vector.broadcast %48 : vector<1x72xf32> to vector<16x72xf32>
    %50 = arith.addf %47, %49 : vector<16x72xf32>
    %51 = vector.shape_cast %50 : vector<16x72xf32> to vector<2x8x72xf32>
    %52 = vector.extract_strided_slice %51 {offsets = [0, 0, 0], sizes = [2, 8, 12], strides = [1, 1, 1]} : vector<2x8x72xf32> to vector<2x8x12xf32>
    %53 = arith.truncf %52 : vector<2x8x12xf32> to vector<2x8x12xbf16>
    %54 = vector.extract_strided_slice %51 {offsets = [0, 0, 24], sizes = [2, 8, 12], strides = [1, 1, 1]} : vector<2x8x72xf32> to vector<2x8x12xf32>
    %55 = arith.truncf %54 : vector<2x8x12xf32> to vector<2x8x12xbf16>
    %56 = vector.extract_strided_slice %51 {offsets = [0, 0, 48], sizes = [2, 8, 12], strides = [1, 1, 1]} : vector<2x8x72xf32> to vector<2x8x12xf32>
    %57 = arith.truncf %56 : vector<2x8x12xf32> to vector<2x8x12xbf16>
    "tpu.trace_start"() <{level = 10 : i32, message = "bqd,bkd->bqk"}> : () -> ()
    %cst_20 = arith.constant dense<0.000000e+00> : vector<2x8x8xf32>
    %58 = tpu.matmul %53, %55, %cst_20 {dimension_numbers = #tpu.dot_dimension_numbers<[2], [2], [1], [1], [0, 0, 0, 1, 1, 1], [0], [0]>} : vector<2x8x12xbf16>, vector<2x8x12xbf16>, vector<2x8x8xf32> -> vector<2x8x8xf32>
    "tpu.trace_stop"() : () -> ()
    %59 = arith.addf %58, %34 : vector<2x8x8xf32>
    %cst_21 = arith.constant dense<0xFF800000> : vector<2x8xf32>
    %60 = vector.multi_reduction <maximumf>, %59, %cst_21 [2] : vector<2x8x8xf32> to vector<2x8xf32>
    %61 = vector.shape_cast %60 : vector<2x8xf32> to vector<2x8x1xf32>
    %62 = vector.broadcast %61 : vector<2x8x1xf32> to vector<2x8x8xf32>
    %63 = arith.subf %59, %62 : vector<2x8x8xf32>
    %64 = math.exp %63 : vector<2x8x8xf32>
    %cst_22 = arith.constant dense<0.000000e+00> : vector<2x8xf32>
    %65 = vector.multi_reduction <add>, %64, %cst_22 [2] : vector<2x8x8xf32> to vector<2x8xf32>
    %66 = vector.shape_cast %65 : vector<2x8xf32> to vector<2x8x1xf32>
    %67 = tpu.reciprocal %66 {approx = true} : vector<2x8x1xf32> -> vector<2x8x1xf32>
    %68 = vector.broadcast %67 : vector<2x8x1xf32> to vector<2x8x8xf32>
    %69 = arith.mulf %64, %68 : vector<2x8x8xf32>
    %70 = arith.truncf %69 : vector<2x8x8xf32> to vector<2x8x8xbf16>
    "tpu.trace_start"() <{level = 10 : i32, message = "bqk,bkd->bqd"}> : () -> ()
    %cst_23 = arith.constant dense<0.000000e+00> : vector<2x8x12xf32>
    %71 = tpu.matmul %70, %57, %cst_23 {dimension_numbers = #tpu.dot_dimension_numbers<[2], [1], [1], [2], [0, 0, 0, 1, 1, 2], [0], [0]>} : vector<2x8x8xbf16>, vector<2x8x12xbf16>, vector<2x8x12xf32> -> vector<2x8x12xf32>
    "tpu.trace_stop"() : () -> ()
    %72 = vector.extract_strided_slice %51 {offsets = [0, 0, 12], sizes = [2, 8, 12], strides = [1, 1, 1]} : vector<2x8x72xf32> to vector<2x8x12xf32>
    %73 = arith.truncf %72 : vector<2x8x12xf32> to vector<2x8x12xbf16>
    %74 = vector.extract_strided_slice %51 {offsets = [0, 0, 36], sizes = [2, 8, 12], strides = [1, 1, 1]} : vector<2x8x72xf32> to vector<2x8x12xf32>
    %75 = arith.truncf %74 : vector<2x8x12xf32> to vector<2x8x12xbf16>
    %76 = vector.extract_strided_slice %51 {offsets = [0, 0, 60], sizes = [2, 8, 12], strides = [1, 1, 1]} : vector<2x8x72xf32> to vector<2x8x12xf32>
    %77 = arith.truncf %76 : vector<2x8x12xf32> to vector<2x8x12xbf16>
    "tpu.trace_start"() <{level = 10 : i32, message = "bqd,bkd->bqk"}> : () -> ()
    %cst_24 = arith.constant dense<0.000000e+00> : vector<2x8x8xf32>
    %78 = tpu.matmul %73, %75, %cst_24 {dimension_numbers = #tpu.dot_dimension_numbers<[2], [2], [1], [1], [0, 0, 0, 1, 1, 1], [0], [0]>} : vector<2x8x12xbf16>, vector<2x8x12xbf16>, vector<2x8x8xf32> -> vector<2x8x8xf32>
    "tpu.trace_stop"() : () -> ()
    %79 = arith.addf %78, %34 : vector<2x8x8xf32>
    %cst_25 = arith.constant dense<0xFF800000> : vector<2x8xf32>
    %80 = vector.multi_reduction <maximumf>, %79, %cst_25 [2] : vector<2x8x8xf32> to vector<2x8xf32>
    %81 = vector.shape_cast %80 : vector<2x8xf32> to vector<2x8x1xf32>
    %82 = vector.broadcast %81 : vector<2x8x1xf32> to vector<2x8x8xf32>
    %83 = arith.subf %79, %82 : vector<2x8x8xf32>
    %84 = math.exp %83 : vector<2x8x8xf32>
    %cst_26 = arith.constant dense<0.000000e+00> : vector<2x8xf32>
    %85 = vector.multi_reduction <add>, %84, %cst_26 [2] : vector<2x8x8xf32> to vector<2x8xf32>
    %86 = vector.shape_cast %85 : vector<2x8xf32> to vector<2x8x1xf32>
    %87 = tpu.reciprocal %86 {approx = true} : vector<2x8x1xf32> -> vector<2x8x1xf32>
    %88 = vector.broadcast %87 : vector<2x8x1xf32> to vector<2x8x8xf32>
    %89 = arith.mulf %84, %88 : vector<2x8x8xf32>
    %90 = arith.truncf %89 : vector<2x8x8xf32> to vector<2x8x8xbf16>
    "tpu.trace_start"() <{level = 10 : i32, message = "bqk,bkd->bqd"}> : () -> ()
    %cst_27 = arith.constant dense<0.000000e+00> : vector<2x8x12xf32>
    %91 = tpu.matmul %90, %77, %cst_27 {dimension_numbers = #tpu.dot_dimension_numbers<[2], [1], [1], [2], [0, 0, 0, 1, 1, 2], [0], [0]>} : vector<2x8x8xbf16>, vector<2x8x12xbf16>, vector<2x8x12xf32> -> vector<2x8x12xf32>
    "tpu.trace_stop"() : () -> ()
    %92 = tpu.concatenate %71, %91 in 2 : vector<2x8x12xf32>, vector<2x8x12xf32> -> vector<2x8x24xf32>
    %93 = vector.shape_cast %92 : vector<2x8x24xf32> to vector<16x24xf32>
    %94 = arith.truncf %93 : vector<16x24xf32> to vector<16x24xbf16>
    %c0_28 = arith.constant 0 : index
    %c0_29 = arith.constant 0 : index
    %c0_30 = arith.constant 0 : index
    %95 = vector.load %arg10[%c0_28, %c0_29, %c0_30] : memref<2x24x24xbf16, #tpu.memory_space<vmem>>, vector<1x24x24xbf16>
    %96 = vector.shape_cast %95 : vector<1x24x24xbf16> to vector<24x24xbf16>
    %cst_31 = arith.constant dense<0.000000e+00> : vector<16x24xf32>
    %97 = tpu.matmul %94, %96, %cst_31 {dimension_numbers = #tpu.dot_dimension_numbers<[1], [0], [0], [1], [0, 0, 1, 1], [], []>} : vector<16x24xbf16>, vector<24x24xbf16>, vector<16x24xf32> -> vector<16x24xf32>
    %98 = vector.extract_strided_slice %43 {offsets = [1, 0], sizes = [1, 24], strides = [1, 1]} : vector<8x72xf32> to vector<1x24xf32>
    %99 = vector.broadcast %98 : vector<1x24xf32> to vector<16x24xf32>
    %100 = arith.addf %97, %99 : vector<16x24xf32>
    %101 = arith.addf %25, %100 : vector<16x24xf32>
    %cst_32 = arith.constant dense<0.000000e+00> : vector<16xf32>
    %102 = vector.multi_reduction <add>, %101, %cst_32 [1] : vector<16x24xf32> to vector<16xf32>
    %103 = vector.shape_cast %102 : vector<16xf32> to vector<16x1xf32>
    %cst_33 = arith.constant 2.400000e+01 : f32
    %104 = vector.broadcast %cst_33 : f32 to vector<16x1xf32>
    %105 = arith.divf %103, %104 : vector<16x1xf32>
    %106 = arith.mulf %101, %101 : vector<16x24xf32>
    %cst_34 = arith.constant dense<0.000000e+00> : vector<16xf32>
    %107 = vector.multi_reduction <add>, %106, %cst_34 [1] : vector<16x24xf32> to vector<16xf32>
    %108 = vector.shape_cast %107 : vector<16xf32> to vector<16x1xf32>
    %cst_35 = arith.constant 2.400000e+01 : f32
    %109 = vector.broadcast %cst_35 : f32 to vector<16x1xf32>
    %110 = arith.divf %108, %109 : vector<16x1xf32>
    %111 = vector.broadcast %105 : vector<16x1xf32> to vector<16x24xf32>
    %112 = arith.subf %101, %111 : vector<16x24xf32>
    %113 = arith.mulf %105, %105 : vector<16x1xf32>
    %114 = arith.subf %110, %113 : vector<16x1xf32>
    %cst_36 = arith.constant 9.99999974E-6 : f32
    %115 = vector.broadcast %cst_36 : f32 to vector<16x1xf32>
    %116 = arith.addf %114, %115 : vector<16x1xf32>
    %117 = math.rsqrt %116 : vector<16x1xf32>
    %118 = vector.broadcast %117 : vector<16x1xf32> to vector<16x24xf32>
    %119 = arith.mulf %112, %118 : vector<16x24xf32>
    %120 = vector.extract_strided_slice %43 {offsets = [2, 0], sizes = [1, 24], strides = [1, 1]} : vector<8x72xf32> to vector<1x24xf32>
    %121 = vector.broadcast %120 : vector<1x24xf32> to vector<16x24xf32>
    %122 = arith.mulf %119, %121 : vector<16x24xf32>
    %123 = vector.extract_strided_slice %43 {offsets = [3, 0], sizes = [1, 24], strides = [1, 1]} : vector<8x72xf32> to vector<1x24xf32>
    %124 = vector.broadcast %123 : vector<1x24xf32> to vector<16x24xf32>
    %125 = arith.addf %122, %124 : vector<16x24xf32>
    %126 = arith.truncf %125 : vector<16x24xf32> to vector<16x24xbf16>
    %c0_37 = arith.constant 0 : index
    %c0_38 = arith.constant 0 : index
    %c0_39 = arith.constant 0 : index
    %127 = vector.load %arg11[%c0_37, %c0_38, %c0_39] : memref<2x24x16xbf16, #tpu.memory_space<vmem>>, vector<1x24x16xbf16>
    %128 = vector.shape_cast %127 : vector<1x24x16xbf16> to vector<24x16xbf16>
    %cst_40 = arith.constant dense<0.000000e+00> : vector<16x16xf32>
    %129 = tpu.matmul %126, %128, %cst_40 {dimension_numbers = #tpu.dot_dimension_numbers<[1], [0], [0], [1], [0, 0, 1, 1], [], []>} : vector<16x24xbf16>, vector<24x16xbf16>, vector<16x16xf32> -> vector<16x16xf32>
    %130 = vector.extract_strided_slice %43 {offsets = [4, 0], sizes = [1, 16], strides = [1, 1]} : vector<8x72xf32> to vector<1x16xf32>
    %131 = vector.broadcast %130 : vector<1x16xf32> to vector<16x16xf32>
    %132 = arith.addf %129, %131 : vector<16x16xf32>
    %cst_41 = arith.constant 0.000000e+00 : f32
    %133 = vector.broadcast %cst_41 : f32 to vector<16x16xf32>
    %134 = arith.maximumf %132, %133 : vector<16x16xf32>
    %135 = arith.truncf %134 : vector<16x16xf32> to vector<16x16xbf16>
    %c0_42 = arith.constant 0 : index
    %c0_43 = arith.constant 0 : index
    %c0_44 = arith.constant 0 : index
    %136 = vector.load %arg12[%c0_42, %c0_43, %c0_44] : memref<2x16x24xbf16, #tpu.memory_space<vmem>>, vector<1x16x24xbf16>
    %137 = vector.shape_cast %136 : vector<1x16x24xbf16> to vector<16x24xbf16>
    %cst_45 = arith.constant dense<0.000000e+00> : vector<16x24xf32>
    %138 = tpu.matmul %135, %137, %cst_45 {dimension_numbers = #tpu.dot_dimension_numbers<[1], [0], [0], [1], [0, 0, 1, 1], [], []>} : vector<16x16xbf16>, vector<16x24xbf16>, vector<16x24xf32> -> vector<16x24xf32>
    %139 = vector.extract_strided_slice %43 {offsets = [5, 0], sizes = [1, 24], strides = [1, 1]} : vector<8x72xf32> to vector<1x24xf32>
    %140 = vector.broadcast %139 : vector<1x24xf32> to vector<16x24xf32>
    %141 = arith.addf %138, %140 : vector<16x24xf32>
    %142 = arith.addf %125, %141 : vector<16x24xf32>
    %cst_46 = arith.constant dense<0.000000e+00> : vector<16xf32>
    %143 = vector.multi_reduction <add>, %142, %cst_46 [1] : vector<16x24xf32> to vector<16xf32>
    %144 = vector.shape_cast %143 : vector<16xf32> to vector<16x1xf32>
    %cst_47 = arith.constant 2.400000e+01 : f32
    %145 = vector.broadcast %cst_47 : f32 to vector<16x1xf32>
    %146 = arith.divf %144, %145 : vector<16x1xf32>
    %147 = arith.mulf %142, %142 : vector<16x24xf32>
    %cst_48 = arith.constant dense<0.000000e+00> : vector<16xf32>
    %148 = vector.multi_reduction <add>, %147, %cst_48 [1] : vector<16x24xf32> to vector<16xf32>
    %149 = vector.shape_cast %148 : vector<16xf32> to vector<16x1xf32>
    %cst_49 = arith.constant 2.400000e+01 : f32
    %150 = vector.broadcast %cst_49 : f32 to vector<16x1xf32>
    %151 = arith.divf %149, %150 : vector<16x1xf32>
    %152 = vector.broadcast %146 : vector<16x1xf32> to vector<16x24xf32>
    %153 = arith.subf %142, %152 : vector<16x24xf32>
    %154 = arith.mulf %146, %146 : vector<16x1xf32>
    %155 = arith.subf %151, %154 : vector<16x1xf32>
    %cst_50 = arith.constant 9.99999974E-6 : f32
    %156 = vector.broadcast %cst_50 : f32 to vector<16x1xf32>
    %157 = arith.addf %155, %156 : vector<16x1xf32>
    %158 = math.rsqrt %157 : vector<16x1xf32>
    %159 = vector.broadcast %158 : vector<16x1xf32> to vector<16x24xf32>
    %160 = arith.mulf %153, %159 : vector<16x24xf32>
    %161 = vector.extract_strided_slice %43 {offsets = [6, 0], sizes = [1, 24], strides = [1, 1]} : vector<8x72xf32> to vector<1x24xf32>
    %162 = vector.broadcast %161 : vector<1x24xf32> to vector<16x24xf32>
    %163 = arith.mulf %160, %162 : vector<16x24xf32>
    %164 = vector.extract_strided_slice %43 {offsets = [7, 0], sizes = [1, 24], strides = [1, 1]} : vector<8x72xf32> to vector<1x24xf32>
    %165 = vector.broadcast %164 : vector<1x24xf32> to vector<16x24xf32>
    %166 = arith.addf %163, %165 : vector<16x24xf32>
    %c1 = arith.constant 1 : index
    %c0_51 = arith.constant 0 : index
    %c0_52 = arith.constant 0 : index
    %167 = vector.load %arg13[%c1, %c0_51, %c0_52] : memref<2x8x72xf32, #tpu.memory_space<vmem>>, vector<1x8x72xf32>
    %168 = vector.shape_cast %167 : vector<1x8x72xf32> to vector<8x72xf32>
    %169 = arith.truncf %166 : vector<16x24xf32> to vector<16x24xbf16>
    %c1_53 = arith.constant 1 : index
    %c0_54 = arith.constant 0 : index
    %c0_55 = arith.constant 0 : index
    %170 = vector.load %arg9[%c1_53, %c0_54, %c0_55] : memref<2x24x72xbf16, #tpu.memory_space<vmem>>, vector<1x24x72xbf16>
    %171 = vector.shape_cast %170 : vector<1x24x72xbf16> to vector<24x72xbf16>
    %cst_56 = arith.constant dense<0.000000e+00> : vector<16x72xf32>
    %172 = tpu.matmul %169, %171, %cst_56 {dimension_numbers = #tpu.dot_dimension_numbers<[1], [0], [0], [1], [0, 0, 1, 1], [], []>} : vector<16x24xbf16>, vector<24x72xbf16>, vector<16x72xf32> -> vector<16x72xf32>
    %173 = vector.extract_strided_slice %168 {offsets = [0, 0], sizes = [1, 72], strides = [1, 1]} : vector<8x72xf32> to vector<1x72xf32>
    %174 = vector.broadcast %173 : vector<1x72xf32> to vector<16x72xf32>
    %175 = arith.addf %172, %174 : vector<16x72xf32>
    %176 = vector.shape_cast %175 : vector<16x72xf32> to vector<2x8x72xf32>
    %177 = vector.extract_strided_slice %176 {offsets = [0, 0, 0], sizes = [2, 8, 12], strides = [1, 1, 1]} : vector<2x8x72xf32> to vector<2x8x12xf32>
    %178 = arith.truncf %177 : vector<2x8x12xf32> to vector<2x8x12xbf16>
    %179 = vector.extract_strided_slice %176 {offsets = [0, 0, 24], sizes = [2, 8, 12], strides = [1, 1, 1]} : vector<2x8x72xf32> to vector<2x8x12xf32>
    %180 = arith.truncf %179 : vector<2x8x12xf32> to vector<2x8x12xbf16>
    %181 = vector.extract_strided_slice %176 {offsets = [0, 0, 48], sizes = [2, 8, 12], strides = [1, 1, 1]} : vector<2x8x72xf32> to vector<2x8x12xf32>
    %182 = arith.truncf %181 : vector<2x8x12xf32> to vector<2x8x12xbf16>
    "tpu.trace_start"() <{level = 10 : i32, message = "bqd,bkd->bqk"}> : () -> ()
    %cst_57 = arith.constant dense<0.000000e+00> : vector<2x8x8xf32>
    %183 = tpu.matmul %178, %180, %cst_57 {dimension_numbers = #tpu.dot_dimension_numbers<[2], [2], [1], [1], [0, 0, 0, 1, 1, 1], [0], [0]>} : vector<2x8x12xbf16>, vector<2x8x12xbf16>, vector<2x8x8xf32> -> vector<2x8x8xf32>
    "tpu.trace_stop"() : () -> ()
    %184 = arith.addf %183, %34 : vector<2x8x8xf32>
    %cst_58 = arith.constant dense<0xFF800000> : vector<2x8xf32>
    %185 = vector.multi_reduction <maximumf>, %184, %cst_58 [2] : vector<2x8x8xf32> to vector<2x8xf32>
    %186 = vector.shape_cast %185 : vector<2x8xf32> to vector<2x8x1xf32>
    %187 = vector.broadcast %186 : vector<2x8x1xf32> to vector<2x8x8xf32>
    %188 = arith.subf %184, %187 : vector<2x8x8xf32>
    %189 = math.exp %188 : vector<2x8x8xf32>
    %cst_59 = arith.constant dense<0.000000e+00> : vector<2x8xf32>
    %190 = vector.multi_reduction <add>, %189, %cst_59 [2] : vector<2x8x8xf32> to vector<2x8xf32>
    %191 = vector.shape_cast %190 : vector<2x8xf32> to vector<2x8x1xf32>
    %192 = tpu.reciprocal %191 {approx = true} : vector<2x8x1xf32> -> vector<2x8x1xf32>
    %193 = vector.broadcast %192 : vector<2x8x1xf32> to vector<2x8x8xf32>
    %194 = arith.mulf %189, %193 : vector<2x8x8xf32>
    %195 = arith.truncf %194 : vector<2x8x8xf32> to vector<2x8x8xbf16>
    "tpu.trace_start"() <{level = 10 : i32, message = "bqk,bkd->bqd"}> : () -> ()
    %cst_60 = arith.constant dense<0.000000e+00> : vector<2x8x12xf32>
    %196 = tpu.matmul %195, %182, %cst_60 {dimension_numbers = #tpu.dot_dimension_numbers<[2], [1], [1], [2], [0, 0, 0, 1, 1, 2], [0], [0]>} : vector<2x8x8xbf16>, vector<2x8x12xbf16>, vector<2x8x12xf32> -> vector<2x8x12xf32>
    "tpu.trace_stop"() : () -> ()
    %197 = vector.extract_strided_slice %176 {offsets = [0, 0, 12], sizes = [2, 8, 12], strides = [1, 1, 1]} : vector<2x8x72xf32> to vector<2x8x12xf32>
    %198 = arith.truncf %197 : vector<2x8x12xf32> to vector<2x8x12xbf16>
    %199 = vector.extract_strided_slice %176 {offsets = [0, 0, 36], sizes = [2, 8, 12], strides = [1, 1, 1]} : vector<2x8x72xf32> to vector<2x8x12xf32>
    %200 = arith.truncf %199 : vector<2x8x12xf32> to vector<2x8x12xbf16>
    %201 = vector.extract_strided_slice %176 {offsets = [0, 0, 60], sizes = [2, 8, 12], strides = [1, 1, 1]} : vector<2x8x72xf32> to vector<2x8x12xf32>
    %202 = arith.truncf %201 : vector<2x8x12xf32> to vector<2x8x12xbf16>
    "tpu.trace_start"() <{level = 10 : i32, message = "bqd,bkd->bqk"}> : () -> ()
    %cst_61 = arith.constant dense<0.000000e+00> : vector<2x8x8xf32>
    %203 = tpu.matmul %198, %200, %cst_61 {dimension_numbers = #tpu.dot_dimension_numbers<[2], [2], [1], [1], [0, 0, 0, 1, 1, 1], [0], [0]>} : vector<2x8x12xbf16>, vector<2x8x12xbf16>, vector<2x8x8xf32> -> vector<2x8x8xf32>
    "tpu.trace_stop"() : () -> ()
    %204 = arith.addf %203, %34 : vector<2x8x8xf32>
    %cst_62 = arith.constant dense<0xFF800000> : vector<2x8xf32>
    %205 = vector.multi_reduction <maximumf>, %204, %cst_62 [2] : vector<2x8x8xf32> to vector<2x8xf32>
    %206 = vector.shape_cast %205 : vector<2x8xf32> to vector<2x8x1xf32>
    %207 = vector.broadcast %206 : vector<2x8x1xf32> to vector<2x8x8xf32>
    %208 = arith.subf %204, %207 : vector<2x8x8xf32>
    %209 = math.exp %208 : vector<2x8x8xf32>
    %cst_63 = arith.constant dense<0.000000e+00> : vector<2x8xf32>
    %210 = vector.multi_reduction <add>, %209, %cst_63 [2] : vector<2x8x8xf32> to vector<2x8xf32>
    %211 = vector.shape_cast %210 : vector<2x8xf32> to vector<2x8x1xf32>
    %212 = tpu.reciprocal %211 {approx = true} : vector<2x8x1xf32> -> vector<2x8x1xf32>
    %213 = vector.broadcast %212 : vector<2x8x1xf32> to vector<2x8x8xf32>
    %214 = arith.mulf %209, %213 : vector<2x8x8xf32>
    %215 = arith.truncf %214 : vector<2x8x8xf32> to vector<2x8x8xbf16>
    "tpu.trace_start"() <{level = 10 : i32, message = "bqk,bkd->bqd"}> : () -> ()
    %cst_64 = arith.constant dense<0.000000e+00> : vector<2x8x12xf32>
    %216 = tpu.matmul %215, %202, %cst_64 {dimension_numbers = #tpu.dot_dimension_numbers<[2], [1], [1], [2], [0, 0, 0, 1, 1, 2], [0], [0]>} : vector<2x8x8xbf16>, vector<2x8x12xbf16>, vector<2x8x12xf32> -> vector<2x8x12xf32>
    "tpu.trace_stop"() : () -> ()
    %217 = tpu.concatenate %196, %216 in 2 : vector<2x8x12xf32>, vector<2x8x12xf32> -> vector<2x8x24xf32>
    %218 = vector.shape_cast %217 : vector<2x8x24xf32> to vector<16x24xf32>
    %219 = arith.truncf %218 : vector<16x24xf32> to vector<16x24xbf16>
    %c1_65 = arith.constant 1 : index
    %c0_66 = arith.constant 0 : index
    %c0_67 = arith.constant 0 : index
    %220 = vector.load %arg10[%c1_65, %c0_66, %c0_67] : memref<2x24x24xbf16, #tpu.memory_space<vmem>>, vector<1x24x24xbf16>
    %221 = vector.shape_cast %220 : vector<1x24x24xbf16> to vector<24x24xbf16>
    %cst_68 = arith.constant dense<0.000000e+00> : vector<16x24xf32>
    %222 = tpu.matmul %219, %221, %cst_68 {dimension_numbers = #tpu.dot_dimension_numbers<[1], [0], [0], [1], [0, 0, 1, 1], [], []>} : vector<16x24xbf16>, vector<24x24xbf16>, vector<16x24xf32> -> vector<16x24xf32>
    %223 = vector.extract_strided_slice %168 {offsets = [1, 0], sizes = [1, 24], strides = [1, 1]} : vector<8x72xf32> to vector<1x24xf32>
    %224 = vector.broadcast %223 : vector<1x24xf32> to vector<16x24xf32>
    %225 = arith.addf %222, %224 : vector<16x24xf32>
    %226 = arith.addf %166, %225 : vector<16x24xf32>
    %cst_69 = arith.constant dense<0.000000e+00> : vector<16xf32>
    %227 = vector.multi_reduction <add>, %226, %cst_69 [1] : vector<16x24xf32> to vector<16xf32>
    %228 = vector.shape_cast %227 : vector<16xf32> to vector<16x1xf32>
    %cst_70 = arith.constant 2.400000e+01 : f32
    %229 = vector.broadcast %cst_70 : f32 to vector<16x1xf32>
    %230 = arith.divf %228, %229 : vector<16x1xf32>
    %231 = arith.mulf %226, %226 : vector<16x24xf32>
    %cst_71 = arith.constant dense<0.000000e+00> : vector<16xf32>
    %232 = vector.multi_reduction <add>, %231, %cst_71 [1] : vector<16x24xf32> to vector<16xf32>
    %233 = vector.shape_cast %232 : vector<16xf32> to vector<16x1xf32>
    %cst_72 = arith.constant 2.400000e+01 : f32
    %234 = vector.broadcast %cst_72 : f32 to vector<16x1xf32>
    %235 = arith.divf %233, %234 : vector<16x1xf32>
    %236 = vector.broadcast %230 : vector<16x1xf32> to vector<16x24xf32>
    %237 = arith.subf %226, %236 : vector<16x24xf32>
    %238 = arith.mulf %230, %230 : vector<16x1xf32>
    %239 = arith.subf %235, %238 : vector<16x1xf32>
    %cst_73 = arith.constant 9.99999974E-6 : f32
    %240 = vector.broadcast %cst_73 : f32 to vector<16x1xf32>
    %241 = arith.addf %239, %240 : vector<16x1xf32>
    %242 = math.rsqrt %241 : vector<16x1xf32>
    %243 = vector.broadcast %242 : vector<16x1xf32> to vector<16x24xf32>
    %244 = arith.mulf %237, %243 : vector<16x24xf32>
    %245 = vector.extract_strided_slice %168 {offsets = [2, 0], sizes = [1, 24], strides = [1, 1]} : vector<8x72xf32> to vector<1x24xf32>
    %246 = vector.broadcast %245 : vector<1x24xf32> to vector<16x24xf32>
    %247 = arith.mulf %244, %246 : vector<16x24xf32>
    %248 = vector.extract_strided_slice %168 {offsets = [3, 0], sizes = [1, 24], strides = [1, 1]} : vector<8x72xf32> to vector<1x24xf32>
    %249 = vector.broadcast %248 : vector<1x24xf32> to vector<16x24xf32>
    %250 = arith.addf %247, %249 : vector<16x24xf32>
    %251 = arith.truncf %250 : vector<16x24xf32> to vector<16x24xbf16>
    %c1_74 = arith.constant 1 : index
    %c0_75 = arith.constant 0 : index
    %c0_76 = arith.constant 0 : index
    %252 = vector.load %arg11[%c1_74, %c0_75, %c0_76] : memref<2x24x16xbf16, #tpu.memory_space<vmem>>, vector<1x24x16xbf16>
    %253 = vector.shape_cast %252 : vector<1x24x16xbf16> to vector<24x16xbf16>
    %cst_77 = arith.constant dense<0.000000e+00> : vector<16x16xf32>
    %254 = tpu.matmul %251, %253, %cst_77 {dimension_numbers = #tpu.dot_dimension_numbers<[1], [0], [0], [1], [0, 0, 1, 1], [], []>} : vector<16x24xbf16>, vector<24x16xbf16>, vector<16x16xf32> -> vector<16x16xf32>
    %255 = vector.extract_strided_slice %168 {offsets = [4, 0], sizes = [1, 16], strides = [1, 1]} : vector<8x72xf32> to vector<1x16xf32>
    %256 = vector.broadcast %255 : vector<1x16xf32> to vector<16x16xf32>
    %257 = arith.addf %254, %256 : vector<16x16xf32>
    %cst_78 = arith.constant 0.000000e+00 : f32
    %258 = vector.broadcast %cst_78 : f32 to vector<16x16xf32>
    %259 = arith.maximumf %257, %258 : vector<16x16xf32>
    %260 = arith.truncf %259 : vector<16x16xf32> to vector<16x16xbf16>
    %c1_79 = arith.constant 1 : index
    %c0_80 = arith.constant 0 : index
    %c0_81 = arith.constant 0 : index
    %261 = vector.load %arg12[%c1_79, %c0_80, %c0_81] : memref<2x16x24xbf16, #tpu.memory_space<vmem>>, vector<1x16x24xbf16>
    %262 = vector.shape_cast %261 : vector<1x16x24xbf16> to vector<16x24xbf16>
    %cst_82 = arith.constant dense<0.000000e+00> : vector<16x24xf32>
    %263 = tpu.matmul %260, %262, %cst_82 {dimension_numbers = #tpu.dot_dimension_numbers<[1], [0], [0], [1], [0, 0, 1, 1], [], []>} : vector<16x16xbf16>, vector<16x24xbf16>, vector<16x24xf32> -> vector<16x24xf32>
    %264 = vector.extract_strided_slice %168 {offsets = [5, 0], sizes = [1, 24], strides = [1, 1]} : vector<8x72xf32> to vector<1x24xf32>
    %265 = vector.broadcast %264 : vector<1x24xf32> to vector<16x24xf32>
    %266 = arith.addf %263, %265 : vector<16x24xf32>
    %267 = arith.addf %250, %266 : vector<16x24xf32>
    %cst_83 = arith.constant dense<0.000000e+00> : vector<16xf32>
    %268 = vector.multi_reduction <add>, %267, %cst_83 [1] : vector<16x24xf32> to vector<16xf32>
    %269 = vector.shape_cast %268 : vector<16xf32> to vector<16x1xf32>
    %cst_84 = arith.constant 2.400000e+01 : f32
    %270 = vector.broadcast %cst_84 : f32 to vector<16x1xf32>
    %271 = arith.divf %269, %270 : vector<16x1xf32>
    %272 = arith.mulf %267, %267 : vector<16x24xf32>
    %cst_85 = arith.constant dense<0.000000e+00> : vector<16xf32>
    %273 = vector.multi_reduction <add>, %272, %cst_85 [1] : vector<16x24xf32> to vector<16xf32>
    %274 = vector.shape_cast %273 : vector<16xf32> to vector<16x1xf32>
    %cst_86 = arith.constant 2.400000e+01 : f32
    %275 = vector.broadcast %cst_86 : f32 to vector<16x1xf32>
    %276 = arith.divf %274, %275 : vector<16x1xf32>
    %277 = vector.broadcast %271 : vector<16x1xf32> to vector<16x24xf32>
    %278 = arith.subf %267, %277 : vector<16x24xf32>
    %279 = arith.mulf %271, %271 : vector<16x1xf32>
    %280 = arith.subf %276, %279 : vector<16x1xf32>
    %cst_87 = arith.constant 9.99999974E-6 : f32
    %281 = vector.broadcast %cst_87 : f32 to vector<16x1xf32>
    %282 = arith.addf %280, %281 : vector<16x1xf32>
    %283 = math.rsqrt %282 : vector<16x1xf32>
    %284 = vector.broadcast %283 : vector<16x1xf32> to vector<16x24xf32>
    %285 = arith.mulf %278, %284 : vector<16x24xf32>
    %286 = vector.extract_strided_slice %168 {offsets = [6, 0], sizes = [1, 24], strides = [1, 1]} : vector<8x72xf32> to vector<1x24xf32>
    %287 = vector.broadcast %286 : vector<1x24xf32> to vector<16x24xf32>
    %288 = arith.mulf %285, %287 : vector<16x24xf32>
    %289 = vector.extract_strided_slice %168 {offsets = [7, 0], sizes = [1, 24], strides = [1, 1]} : vector<8x72xf32> to vector<1x24xf32>
    %290 = vector.broadcast %289 : vector<1x24xf32> to vector<16x24xf32>
    %291 = arith.addf %288, %290 : vector<16x24xf32>
    %292 = vector.shape_cast %291 : vector<16x24xf32> to vector<2x8x24xf32>
    %293 = arith.mulf %292, %41 : vector<2x8x24xf32>
    %cst_88 = arith.constant dense<0.000000e+00> : vector<2x24xf32>
    %294 = vector.multi_reduction <add>, %293, %cst_88 [1] : vector<2x8x24xf32> to vector<2x24xf32>
    %cst_89 = arith.constant 1.000000e+00 : f32
    %295 = vector.broadcast %cst_89 : f32 to vector<2x1xf32>
    %296 = arith.addf %26, %295 : vector<2x1xf32>
    %297 = vector.broadcast %296 : vector<2x1xf32> to vector<2x24xf32>
    %298 = arith.divf %294, %297 : vector<2x24xf32>
    %c0_90 = arith.constant 0 : index
    %c0_91 = arith.constant 0 : index
    %299 = vector.load %arg14[%c0_90, %c0_91] : memref<2x24xf32, #tpu.memory_space<vmem>>, vector<2x24xf32>
    tpu.vector_store %arg14[%c0_90, %c0_91], %298 {strides = array<i32>} : memref<2x24xf32, #tpu.memory_space<vmem>>, vector<2x24xf32>,
    %c0_92 = arith.constant 0 : index
    %c0_93 = arith.constant 0 : index
    %300 = vector.load %arg3[%c0_92, %c0_93] : memref<2x3xf32, #tpu.memory_space<vmem>>, vector<2x3xf32>
    %c0_94 = arith.constant 0 : index
    %c0_95 = arith.constant 0 : index
    %301 = vector.load %arg7[%c0_94, %c0_95] : memref<3x4xf32, #tpu.memory_space<vmem>>, vector<3x4xf32>
    %cst_96 = arith.constant 0.000000e+00 : f32
    %302 = vector.broadcast %cst_96 : f32 to vector<2x4xf32>
    %c0_97 = arith.constant 0 : index
    %c0_98 = arith.constant 0 : index
    %303 = vector.load %arg8[%c0_97, %c0_98] : memref<1x4xf32, #tpu.memory_space<vmem>>, vector<1x4xf32>
    %304 = vector.broadcast %303 : vector<1x4xf32> to vector<2x4xf32>
    %305 = arith.addf %302, %304 : vector<2x4xf32>
    %306 = vector.extract_strided_slice %300 {offsets = [0, 0], sizes = [2, 1], strides = [1, 1]} : vector<2x3xf32> to vector<2x1xf32>
    %307 = vector.extract_strided_slice %301 {offsets = [0, 0], sizes = [1, 4], strides = [1, 1]} : vector<3x4xf32> to vector<1x4xf32>
    %308 = vector.broadcast %306 : vector<2x1xf32> to vector<2x4xf32>
    %309 = vector.broadcast %307 : vector<1x4xf32> to vector<2x4xf32>
    %310 = arith.mulf %308, %309 : vector<2x4xf32>
    %311 = arith.addf %305, %310 : vector<2x4xf32>
    %312 = vector.extract_strided_slice %300 {offsets = [0, 1], sizes = [2, 1], strides = [1, 1]} : vector<2x3xf32> to vector<2x1xf32>
    %313 = vector.extract_strided_slice %301 {offsets = [1, 0], sizes = [1, 4], strides = [1, 1]} : vector<3x4xf32> to vector<1x4xf32>
    %314 = vector.broadcast %312 : vector<2x1xf32> to vector<2x4xf32>
    %315 = vector.broadcast %313 : vector<1x4xf32> to vector<2x4xf32>
    %316 = arith.mulf %314, %315 : vector<2x4xf32>
    %317 = arith.addf %311, %316 : vector<2x4xf32>
    %318 = vector.extract_strided_slice %300 {offsets = [0, 2], sizes = [2, 1], strides = [1, 1]} : vector<2x3xf32> to vector<2x1xf32>
    %319 = vector.extract_strided_slice %301 {offsets = [2, 0], sizes = [1, 4], strides = [1, 1]} : vector<3x4xf32> to vector<1x4xf32>
    %320 = vector.broadcast %318 : vector<2x1xf32> to vector<2x4xf32>
    %321 = vector.broadcast %319 : vector<1x4xf32> to vector<2x4xf32>
    %322 = arith.mulf %320, %321 : vector<2x4xf32>
    %323 = arith.addf %317, %322 : vector<2x4xf32>
    %c0_99 = arith.constant 0 : index
    %c0_100 = arith.constant 0 : index
    %324 = vector.load %arg15[%c0_99, %c0_100] : memref<2x4xf32, #tpu.memory_space<vmem>>, vector<2x4xf32>
    tpu.vector_store %arg15[%c0_99, %c0_100], %323 {strides = array<i32>} : memref<2x4xf32, #tpu.memory_space<vmem>>, vector<2x4xf32>,
    return
  }
  func.func @transform_0(%arg0: i32) -> (i32, i32) {
    %c0_i32 = arith.constant 0 : i32
    %c0_i32_0 = arith.constant 0 : i32
    %c0_i32_1 = arith.constant 0 : i32
    return %c0_i32, %c0_i32_0 : i32, i32
  }
  func.func @transform_1(%arg0: i32) -> (i32, i32) {
    %c0_i32 = arith.constant 0 : i32
    %c0_i32_0 = arith.constant 0 : i32
    %c0_i32_1 = arith.constant 0 : i32
    return %c0_i32, %c0_i32_0 : i32, i32
  }
  func.func @transform_2(%arg0: i32) -> (i32, i32) {
    %c0_i32 = arith.constant 0 : i32
    %c0_i32_0 = arith.constant 0 : i32
    %c0_i32_1 = arith.constant 0 : i32
    return %c0_i32, %c0_i32_0 : i32, i32
  }
  func.func @transform_3(%arg0: i32) -> (i32, i32) {
    %c0_i32 = arith.constant 0 : i32
    %c0_i32_0 = arith.constant 0 : i32
    %c0_i32_1 = arith.constant 0 : i32
    return %c0_i32, %c0_i32_0 : i32, i32
  }
  func.func @transform_4(%arg0: i32) -> (i32, i32) {
    %c0_i32 = arith.constant 0 : i32
    %c0_i32_0 = arith.constant 0 : i32
    %c0_i32_1 = arith.constant 0 : i32
    return %c0_i32, %c0_i32_0 : i32, i32
  }
  func.func @transform_5(%arg0: i32) -> (i32, i32) {
    %c0_i32 = arith.constant 0 : i32
    %c0_i32_0 = arith.constant 0 : i32
    %c0_i32_1 = arith.constant 0 : i32
    return %c0_i32, %c0_i32_0 : i32, i32
  }
  func.func @transform_6(%arg0: i32) -> (i32, i32) {
    %c0_i32 = arith.constant 0 : i32
    %c0_i32_0 = arith.constant 0 : i32
    %c0_i32_1 = arith.constant 0 : i32
    return %c0_i32, %c0_i32_0 : i32, i32
  }
  func.func @transform_7(%arg0: i32) -> (i32, i32) {
    %c0_i32 = arith.constant 0 : i32
    %c0_i32_0 = arith.constant 0 : i32
    %c0_i32_1 = arith.constant 0 : i32
    return %c0_i32, %c0_i32_0 : i32, i32
  }
  func.func @transform_8(%arg0: i32) -> (i32, i32, i32) {
    %c0_i32 = arith.constant 0 : i32
    %c0_i32_0 = arith.constant 0 : i32
    %c0_i32_1 = arith.constant 0 : i32
    %c0_i32_2 = arith.constant 0 : i32
    return %c0_i32, %c0_i32_0, %c0_i32_1 : i32, i32, i32
  }
  func.func @transform_9(%arg0: i32) -> (i32, i32, i32) {
    %c0_i32 = arith.constant 0 : i32
    %c0_i32_0 = arith.constant 0 : i32
    %c0_i32_1 = arith.constant 0 : i32
    %c0_i32_2 = arith.constant 0 : i32
    return %c0_i32, %c0_i32_0, %c0_i32_1 : i32, i32, i32
  }
  func.func @transform_10(%arg0: i32) -> (i32, i32, i32) {
    %c0_i32 = arith.constant 0 : i32
    %c0_i32_0 = arith.constant 0 : i32
    %c0_i32_1 = arith.constant 0 : i32
    %c0_i32_2 = arith.constant 0 : i32
    return %c0_i32, %c0_i32_0, %c0_i32_1 : i32, i32, i32
  }
  func.func @transform_11(%arg0: i32) -> (i32, i32, i32) {
    %c0_i32 = arith.constant 0 : i32
    %c0_i32_0 = arith.constant 0 : i32
    %c0_i32_1 = arith.constant 0 : i32
    %c0_i32_2 = arith.constant 0 : i32
    return %c0_i32, %c0_i32_0, %c0_i32_1 : i32, i32, i32
  }
  func.func @transform_12(%arg0: i32) -> (i32, i32, i32) {
    %c0_i32 = arith.constant 0 : i32
    %c0_i32_0 = arith.constant 0 : i32
    %c0_i32_1 = arith.constant 0 : i32
    %c0_i32_2 = arith.constant 0 : i32
    return %c0_i32, %c0_i32_0, %c0_i32_1 : i32, i32, i32
  }
  func.func @transform_13(%arg0: i32) -> (i32, i32) {
    %c0_i32 = arith.constant 0 : i32
    %c0_i32_0 = arith.constant 0 : i32
    %c0_i32_1 = arith.constant 0 : i32
    return %c0_i32, %c0_i32_0 : i32, i32
  }
  func.func @transform_14(%arg0: i32) -> (i32, i32) {
    %c0_i32 = arith.constant 0 : i32
    %c0_i32_0 = arith.constant 0 : i32
    %c0_i32_1 = arith.constant 0 : i32
    return %c0_i32, %c0_i32_0 : i32, i32
  }
}

</mosaic_0001>

<llo_original>
// kernel: raindrop_forward.1
$region0: #{raindrop_forward.1}
  #allocation0 [shape = 'u32[]', space=smem, size = 0x4, offset = 0x4, fixed_abs, tag = 'smem constant byte address 0x4 - core index']
  #allocation1 [shape = 'u32[144,128]{1,0:T(1,128)}', space=vmem, size = 0x12000, scoped, tag = 'internal scratch']
  %s0 = inlined_call_operand.vmem [shape: f32[16,4], index: 0, kind: input, shape index: {}]
  %s1 = inlined_call_operand.vmem [shape: f32[16,1], index: 1, kind: input, shape index: {}]
  %s2 = inlined_call_operand.vmem [shape: f32[2,3], index: 2, kind: input, shape index: {}]
  %s3 = inlined_call_operand.vmem [shape: f32[2,1], index: 3, kind: input, shape index: {}]
  %s4 = inlined_call_operand.vmem [shape: bf16[4,24], index: 4, kind: input, shape index: {}]
  %s5 = inlined_call_operand.vmem [shape: f32[1,24], index: 5, kind: input, shape index: {}]
  %s6 = inlined_call_operand.vmem [shape: f32[3,4], index: 6, kind: input, shape index: {}]
  %s7 = inlined_call_operand.vmem [shape: f32[1,4], index: 7, kind: input, shape index: {}]
  %s8 = inlined_call_operand.vmem [shape: bf16[2,24,72], index: 8, kind: input, shape index: {}]
  %s9 = inlined_call_operand.vmem [shape: bf16[2,24,24], index: 9, kind: input, shape index: {}]
  %s10 = inlined_call_operand.vmem [shape: bf16[2,24,16], index: 10, kind: input, shape index: {}]
  %s11 = inlined_call_operand.vmem [shape: bf16[2,16,24], index: 11, kind: input, shape index: {}]
  %s12 = inlined_call_operand.vmem [shape: f32[2,8,72], index: 12, kind: input, shape index: {}]
  %s13 = inlined_call_operand.vmem [shape: f32[2,24], index: 13, kind: output, shape index: {0}]
  %s14 = inlined_call_operand.vmem [shape: f32[2,4], index: 14, kind: output, shape index: {1}]
  %15 = xla_tuple %s13, %s14
  %s16 = sld [smem:[#allocation0]]
  $region70: #{raindrop_forward.1} parent=0
    _
  %s18 = ssub.s32 1, %s16
  %s19 = scalar_select 0, %s18, %s16
  // Predicated region
  $region2: #{raindrop_forward.1} parent=0 // pred_check
    _
  $region3: #{raindrop_forward.1} parent=0 // pred_check_branch
    %21 = sbr.rel (0) target = $region5
  $region4: #{raindrop_forward.1} parent=0 // pred_region
    _
  $region5: #{raindrop_forward.1} parent=0 // pred_fallthru
    _
  // Predicated region
  $region6: #{raindrop_forward.1} parent=0 // pred_check
    _
  $region7: #{raindrop_forward.1} parent=0 // pred_check_branch
    %23 = sbr.rel (0) target = $region9
  $region8: #{raindrop_forward.1} parent=0 // pred_region
    _
  $region9: #{raindrop_forward.1} parent=0 // pred_fallthru
    _
  // Predicated region
  $region10: #{raindrop_forward.1} parent=0 // pred_check
    _
  $region11: #{raindrop_forward.1} parent=0 // pred_check_branch
    %25 = sbr.rel (0) target = $region13
  $region12: #{raindrop_forward.1} parent=0 // pred_region
    _
  $region13: #{raindrop_forward.1} parent=0 // pred_fallthru
    _
  // Predicated region
  $region14: #{raindrop_forward.1} parent=0 // pred_check
    _
  $region15: #{raindrop_forward.1} parent=0 // pred_check_branch
    %27 = sbr.rel (0) target = $region17
  $region16: #{raindrop_forward.1} parent=0 // pred_region
    _
  $region17: #{raindrop_forward.1} parent=0 // pred_fallthru
    _
  // Predicated region
  $region18: #{raindrop_forward.1} parent=0 // pred_check
    _
  $region19: #{raindrop_forward.1} parent=0 // pred_check_branch
    %29 = sbr.rel (0) target = $region21
  $region20: #{raindrop_forward.1} parent=0 // pred_region
    _
  $region21: #{raindrop_forward.1} parent=0 // pred_fallthru
    _
  // Predicated region
  $region22: #{raindrop_forward.1} parent=0 // pred_check
    _
  $region23: #{raindrop_forward.1} parent=0 // pred_check_branch
    %31 = sbr.rel (0) target = $region25
  $region24: #{raindrop_forward.1} parent=0 // pred_region
    _
  $region25: #{raindrop_forward.1} parent=0 // pred_fallthru
    _
  // Predicated region
  $region26: #{raindrop_forward.1} parent=0 // pred_check
    _
  $region27: #{raindrop_forward.1} parent=0 // pred_check_branch
    %33 = sbr.rel (0) target = $region29
  $region28: #{raindrop_forward.1} parent=0 // pred_region
    _
  $region29: #{raindrop_forward.1} parent=0 // pred_fallthru
    _
  // Predicated region
  $region30: #{raindrop_forward.1} parent=0 // pred_check
    _
  $region31: #{raindrop_forward.1} parent=0 // pred_check_branch
    %35 = sbr.rel (0) target = $region33
  $region32: #{raindrop_forward.1} parent=0 // pred_region
    _
  $region33: #{raindrop_forward.1} parent=0 // pred_fallthru
    _
  // Predicated region
  $region34: #{raindrop_forward.1} parent=0 // pred_check
    _
  $region35: #{raindrop_forward.1} parent=0 // pred_check_branch
    %37 = sbr.rel (0) target = $region37
  $region36: #{raindrop_forward.1} parent=0 // pred_region
    _
  $region37: #{raindrop_forward.1} parent=0 // pred_fallthru
    _
  // Predicated region
  $region38: #{raindrop_forward.1} parent=0 // pred_check
    _
  $region39: #{raindrop_forward.1} parent=0 // pred_check_branch
    %39 = sbr.rel (0) target = $region41
  $region40: #{raindrop_forward.1} parent=0 // pred_region
    _
  $region41: #{raindrop_forward.1} parent=0 // pred_fallthru
    _
  // Predicated region
  $region42: #{raindrop_forward.1} parent=0 // pred_check
    _
  $region43: #{raindrop_forward.1} parent=0 // pred_check_branch
    %41 = sbr.rel (0) target = $region45
  $region44: #{raindrop_forward.1} parent=0 // pred_region
    _
  $region45: #{raindrop_forward.1} parent=0 // pred_fallthru
    _
  // Predicated region
  $region46: #{raindrop_forward.1} parent=0 // pred_check
    _
  $region47: #{raindrop_forward.1} parent=0 // pred_check_branch
    %43 = sbr.rel (0) target = $region49
  $region48: #{raindrop_forward.1} parent=0 // pred_region
    _
  $region49: #{raindrop_forward.1} parent=0 // pred_fallthru
    _
  // Predicated region
  $region50: #{raindrop_forward.1} parent=0 // pred_check
    _
  $region51: #{raindrop_forward.1} parent=0 // pred_check_branch
    %45 = sbr.rel (0) target = $region53
  $region52: #{raindrop_forward.1} parent=0 // pred_region
    _
  $region53: #{raindrop_forward.1} parent=0 // pred_fallthru
    _
  %v47 = vld [vmem:[%s0] sm:$0xff]
  %v48 = vld [vmem:[%s0 + $0x8] sm:$0xff]
  %v49 = vpack.c.bf16 %v48, %v47
  %v50 = vld [vmem:[%s4] sm:$0x3]
  %vm51 = vcmask 31744
  %v53 = vsel %vm51, %v49, 0
  %vm55 = vcmask 1041408
  %v57 = vsel %vm55, %v50, 0
  %59 = vmatprep.subr.bf16.mxu0 0
  %60 = vmatpush1.bf16.msra.mxu0 0
  %61 = vmatprep.subr.bf16.mxu0 0
  %62 = vmatpush1.bf16.msra.mxu0 0
  %63 = vmatprep.subr.bf16.mxu0 0
  %64 = vmatpush1.bf16.msra.mxu0 0
  %65 = vmatprep.subr.bf16.mxu0 0
  %66 = vmatpush1.bf16.msra.mxu0 0
  %67 = vmatprep.subr.bf16.mxu0 0
  %68 = vmatpush1.bf16.msra.mxu0 0
  %69 = vmatprep.subr.bf16.mxu0 0
  %70 = vmatpush1.bf16.msra.mxu0 0
  %71 = vmatprep.subr.bf16.mxu0 0
  %72 = vmatpush1.bf16.msra.mxu0 0
  %73 = vmatprep.subr.bf16.mxu0 0
  %74 = vmatpush1.bf16.msra.mxu0 %v57
  %75 = vmatprep.subr.bf16.mxu0 0
  %76 = vmatpush2.bf16.msra.mxu0 0
  %77 = vmatprep.subr.bf16.mxu0 0
  %78 = vmatpush2.bf16.msra.mxu0 0
  %79 = vmatprep.subr.bf16.mxu0 0
  %80 = vmatpush2.bf16.msra.mxu0 0
  %81 = vmatprep.subr.bf16.mxu0 0
  %82 = vmatpush2.bf16.msra.mxu0 0
  %83 = vmatprep.subr.bf16.mxu0 0
  %84 = vmatpush2.bf16.msra.mxu0 0
  %85 = vmatprep.subr.bf16.mxu0 0
  %86 = vmatpush2.bf16.msra.mxu0 0
  %87 = vmatprep.subr.bf16.mxu0 0
  %88 = vmatpush2.bf16.msra.mxu0 0
  %89 = vmatprep.subr.bf16.mxu0 0
  %90 = vmatpush2.bf16.msra.mxu0 0
  %91 = vmatprep.mubr.bf16.mxu0 0
  %92 = vmatmul.mubr.bf16.gmra.mxu0 %v53
  %v93 = vpop.f32.mrf.mxu0
  %v94 = vadd.f32 0.0, %v93
  %v95 = vpop.f32.mrf.mxu0
  %v96 = vpop.f32.mrf.mxu0
  %v97 = vadd.f32 0.0, %v96
  %v98 = vpop.f32.mrf.mxu0
  %99 = vdwg.mxu0
  %v100 = vmax.f32 %v94, 0.0
  %v101 = vmax.f32 %v97, 0.0
  %v102 = vld [vmem:[%s1] sm:$0xff]
  %v103 = vld [vmem:[%s1 + $0x8] sm:$0xff]
  %v104 = vld [vmem:[%s5] sm:$0x1]
  %106 = vset.pattern.permute.xlu0 0
  %107 = vperm.xlu0 %106, %v102
  %v108 = vpop.permute.xlu0 %107
  %111 = vset.pattern.permute.xlu0 0
  %112 = vperm.xlu0 %111, %v103
  %v113 = vpop.permute.xlu0 %112
  %v116 = vlaneseq
  %v117 = vshrl.u32 %v116, 7
  %v118 = vsub.s32 0, %v117
  %v119 = vrot.slane %v104, %v118
  %v121 = vmul.f32 %v108, %v119
  %v122 = vmul.f32 %v113, %v119
  %v123 = vlaneseq
  %v124 = vand.u32 %v123, 127
  %vm125 = vcmp.lt.s32.totalorder %v124, 8
  %vm126 = vcmp.lt.s32.totalorder %v124, 16
  %v127 = vand.u32 2147483647, %v121
  %vm128 = vcmp.le.f32.partialorder %v127, 0.7853982
  %vm129 = vcmp.lt.s32.totalorder %v121, 0
  %v130 = vand.u32 %v121, 2139095040
  %v131 = vshrl.u32 %v130, 23
  %v132 = vsub.s32 %v131, 127
  %v133 = vand.u32 2147483647, %v121
  %v134 = vand.u32 %v133, 8388607
  %v135 = vor.u32 %v134, 8388608
  %v136 = vsub.s32 0, %v135
  %v137 = vadd.s32 %v132, 1
  %vm138 = vcmp.gt.s32.totalorder %v137, 0
  %v139 = vsel %vm138, %v137, 0
  %v140 = vshrl.u32 %v139, 5
  %v141 = vand.u32 %v139, 31
  %v142 = vsub.s32 32, %v141
  %v143 = vshrl.u32 683565275, %v142
  %v144 = vshll.u32 683565275, %v141
  %v145 = vshrl.u32 2475754826, %v142
  %v146 = vor.u32 %v144, %v145
  %v147 = vshll.u32 2475754826, %v141
  %v148 = vshrl.u32 2131351028, %v142
  %v149 = vor.u32 %v147, %v148
  %v150 = vshll.u32 2131351028, %v141
  %v151 = vshrl.u32 2102212464, %v142
  %v152 = vor.u32 %v150, %v151
  %v153 = vshll.u32 2102212464, %v141
  %v154 = vshrl.u32 920167782, %v142
  %v155 = vor.u32 %v153, %v154
  %v156 = vshll.u32 920167782, %v141
  %v157 = vshrl.u32 1326507024, %v142
  %v158 = vor.u32 %v156, %v157
  %vm159 = vcmp.lt.s32.totalorder %v140, 1
  %vm160 = vcmp.lt.s32.totalorder %v140, 2
  %vm161 = vcmp.lt.s32.totalorder %v140, 3
  %vm162 = vcmp.lt.s32.totalorder %v140, 4
  %v163 = vsel %vm159, %v143, %v146
  %v164 = vsel %vm162, %v152, 2102212464
  %v165 = vsel %vm161, %v149, %v164
  %v166 = vsel %vm160, %v163, %v165
  %v167 = vsel %vm159, %v146, %v149
  %v168 = vsel %vm162, %v155, 920167782
  %v169 = vsel %vm161, %v152, %v168
  %v170 = vsel %vm160, %v167, %v169
  %v171 = vsel %vm159, %v149, %v152
  %v172 = vsel %vm162, %v158, 1326507024
  %v173 = vsel %vm161, %v155, %v172
  %v174 = vsel %vm160, %v171, %v173
  %v175 = vshll.u32 %v135, 8
  %v176 = vmul.u32.u64.compose %v175, %v174
  %v177 = vextract.low.u32 %v176
  %v178 = vextract.high.u32 %v176
  %v179 = vmul.u32.u64.compose %v175, %v170
  %v180 = vextract.low.u32 %v179
  %v181 = vextract.high.u32 %v179
  %v182 = vmul.u32 %v175, %v166
  %v183 = vadd.s32 %v178, %v180
  %vm184 = vc.u32 %v178, %v180
  %v185 = vadd.s32 %v181, 1
  %v186 = vsel %vm184, %v185, %v181
  %v187 = vadd.s32 %v182, %v186
  %v188 = vadd.s32 %v187, 536870912
  %v189 = vshrl.u32 %v188, 30
  %v190 = vshll.u32 %v189, 30
  %v191 = vsub.s32 %v187, %v190
  %vm192 = vcmp.lt.s32.totalorder %v191, 0
  %v193 = vsub.s32 0, %v191
  %v194 = vsel %vm192, %v193, %v191
  %v195 = vclz %v194
  %v196 = vsub.s32 %v195, 2
  %vm197 = vcmp.gt.s32.totalorder 0, %v196
  %v198 = vsel %vm197, 0, %v196
  %v199 = vsub.s32 32, %v198
  %v200 = vshll.u32 %v191, %v198
  %v201 = vshrl.u32 %v183, %v199
  %v202 = vor.u32 %v200, %v201
  %v203 = vsub.s32 4294967266, %v198
  %v204 = vadd.s32 %v203, 127
  %v205 = vshll.u32 %v204, 23
  %v206 = vor.u32 4788187, %v205
  %v207 = vand.u32 2147483647, %v206
  %v209 = vcvt.s32.f32 %v202
  %v210 = vmul.f32 %v209, %v207
  %v211 = vxor.u32 %v210, 2147483648
  %v212 = vsel %vm129, %v211, %v210
  %v213 = vsub.s32 4, %v189
  %v214 = vsel %vm129, %v213, %v189
  %v215 = vsel %vm128, %v121, %v212
  %v216 = vsel %vm128, 0, %v214
  %v217 = vcosq.f32.pop %v215
  %v218 = vsinq.f32.pop %v215
  %vm219 = vweird.f32 %v121
  %v220 = vadd.s32 %v216, 3
  %v221 = vand.u32 %v220, 3
  %vm222 = vcmp.lt.s32.totalorder %v221, 2
  %vm223 = vcmp.eq.s32.totalorder %v221, 0
  %v224 = vxor.u32 %v218, 2147483648
  %v225 = vsel %vm223, %v217, %v224
  %vm226 = vcmp.eq.s32.totalorder %v221, 2
  %v227 = vxor.u32 %v217, 2147483648
  %v228 = vsel %vm226, %v227, %v218
  %v229 = vsel %vm222, %v225, %v228
  %v230 = vsel %vm219, nan, %v229
  %v231 = vand.u32 2147483647, %v122
  %vm232 = vcmp.le.f32.partialorder %v231, 0.7853982
  %vm233 = vcmp.lt.s32.totalorder %v122, 0
  %v234 = vand.u32 %v122, 2139095040
  %v235 = vshrl.u32 %v234, 23
  %v236 = vsub.s32 %v235, 127
  %v237 = vand.u32 2147483647, %v122
  %v238 = vand.u32 %v237, 8388607
  %v239 = vor.u32 %v238, 8388608
  %v240 = vsub.s32 0, %v239
  %v241 = vadd.s32 %v236, 1
  %vm242 = vcmp.gt.s32.totalorder %v241, 0
  %v243 = vsel %vm242, %v241, 0
  %v244 = vshrl.u32 %v243, 5
  %v245 = vand.u32 %v243, 31
  %v246 = vsub.s32 32, %v245
  %v247 = vshrl.u32 683565275, %v246
  %v248 = vshll.u32 683565275, %v245
  %v249 = vshrl.u32 2475754826, %v246
  %v250 = vor.u32 %v248, %v249
  %v251 = vshll.u32 2475754826, %v245
  %v252 = vshrl.u32 2131351028, %v246
  %v253 = vor.u32 %v251, %v252
  %v254 = vshll.u32 2131351028, %v245
  %v255 = vshrl.u32 2102212464, %v246
  %v256 = vor.u32 %v254, %v255
  %v257 = vshll.u32 2102212464, %v245
  %v258 = vshrl.u32 920167782, %v246
  %v259 = vor.u32 %v257, %v258
  %v260 = vshll.u32 920167782, %v245
  %v261 = vshrl.u32 1326507024, %v246
  %v262 = vor.u32 %v260, %v261
  %vm263 = vcmp.lt.s32.totalorder %v244, 1
  %vm264 = vcmp.lt.s32.totalorder %v244, 2
  %vm265 = vcmp.lt.s32.totalorder %v244, 3
  %vm266 = vcmp.lt.s32.totalorder %v244, 4
  %v267 = vsel %vm263, %v247, %v250
  %v268 = vsel %vm266, %v256, 2102212464
  %v269 = vsel %vm265, %v253, %v268
  %v270 = vsel %vm264, %v267, %v269
  %v271 = vsel %vm263, %v250, %v253
  %v272 = vsel %vm266, %v259, 920167782
  %v273 = vsel %vm265, %v256, %v272
  %v274 = vsel %vm264, %v271, %v273
  %v275 = vsel %vm263, %v253, %v256
  %v276 = vsel %vm266, %v262, 1326507024
  %v277 = vsel %vm265, %v259, %v276
  %v278 = vsel %vm264, %v275, %v277
  %v279 = vshll.u32 %v239, 8
  %v280 = vmul.u32.u64.compose %v279, %v278
  %v281 = vextract.low.u32 %v280
  %v282 = vextract.high.u32 %v280
  %v283 = vmul.u32.u64.compose %v279, %v274
  %v284 = vextract.low.u32 %v283
  %v285 = vextract.high.u32 %v283
  %v286 = vmul.u32 %v279, %v270
  %v287 = vadd.s32 %v282, %v284
  %vm288 = vc.u32 %v282, %v284
  %v289 = vadd.s32 %v285, 1
  %v290 = vsel %vm288, %v289, %v285
  %v291 = vadd.s32 %v286, %v290
  %v292 = vadd.s32 %v291, 536870912
  %v293 = vshrl.u32 %v292, 30
  %v294 = vshll.u32 %v293, 30
  %v295 = vsub.s32 %v291, %v294
  %vm296 = vcmp.lt.s32.totalorder %v295, 0
  %v297 = vsub.s32 0, %v295
  %v298 = vsel %vm296, %v297, %v295
  %v299 = vclz %v298
  %v300 = vsub.s32 %v299, 2
  %vm301 = vcmp.gt.s32.totalorder 0, %v300
  %v302 = vsel %vm301, 0, %v300
  %v303 = vsub.s32 32, %v302
  %v304 = vshll.u32 %v295, %v302
  %v305 = vshrl.u32 %v287, %v303
  %v306 = vor.u32 %v304, %v305
  %v307 = vsub.s32 4294967266, %v302
  %v308 = vadd.s32 %v307, 127
  %v309 = vshll.u32 %v308, 23
  %v310 = vor.u32 4788187, %v309
  %v311 = vand.u32 2147483647, %v310
  %v313 = vcvt.s32.f32 %v306
  %v314 = vmul.f32 %v313, %v311
  %v315 = vxor.u32 %v314, 2147483648
  %v316 = vsel %vm233, %v315, %v314
  %v317 = vsub.s32 4, %v293
  %v318 = vsel %vm233, %v317, %v293
  %v319 = vsel %vm232, %v122, %v316
  %v320 = vsel %vm232, 0, %v318
  %v321 = vcosq.f32.pop %v319
  %v322 = vsinq.f32.pop %v319
  %vm323 = vweird.f32 %v122
  %v324 = vadd.s32 %v320, 3
  %v325 = vand.u32 %v324, 3
  %vm326 = vcmp.lt.s32.totalorder %v325, 2
  %vm327 = vcmp.eq.s32.totalorder %v325, 0
  %v328 = vxor.u32 %v322, 2147483648
  %v329 = vsel %vm327, %v321, %v328
  %vm330 = vcmp.eq.s32.totalorder %v325, 2
  %v331 = vxor.u32 %v321, 2147483648
  %v332 = vsel %vm330, %v331, %v322
  %v333 = vsel %vm326, %v329, %v332
  %v334 = vsel %vm323, nan, %v333
  %v335 = vand.u32 2147483647, %v121
  %vm336 = vcmp.le.f32.partialorder %v335, 0.7853982
  %vm337 = vcmp.lt.s32.totalorder %v121, 0
  %v338 = vand.u32 %v121, 2139095040
  %v339 = vshrl.u32 %v338, 23
  %v340 = vsub.s32 %v339, 127
  %v341 = vand.u32 2147483647, %v121
  %v342 = vand.u32 %v341, 8388607
  %v343 = vor.u32 %v342, 8388608
  %v344 = vsub.s32 0, %v343
  %v345 = vadd.s32 %v340, 1
  %vm346 = vcmp.gt.s32.totalorder %v345, 0
  %v347 = vsel %vm346, %v345, 0
  %v348 = vshrl.u32 %v347, 5
  %v349 = vand.u32 %v347, 31
  %v350 = vsub.s32 32, %v349
  %v351 = vshrl.u32 683565275, %v350
  %v352 = vshll.u32 683565275, %v349
  %v353 = vshrl.u32 2475754826, %v350
  %v354 = vor.u32 %v352, %v353
  %v355 = vshll.u32 2475754826, %v349
  %v356 = vshrl.u32 2131351028, %v350
  %v357 = vor.u32 %v355, %v356
  %v358 = vshll.u32 2131351028, %v349
  %v359 = vshrl.u32 2102212464, %v350
  %v360 = vor.u32 %v358, %v359
  %v361 = vshll.u32 2102212464, %v349
  %v362 = vshrl.u32 920167782, %v350
  %v363 = vor.u32 %v361, %v362
  %v364 = vshll.u32 920167782, %v349
  %v365 = vshrl.u32 1326507024, %v350
  %v366 = vor.u32 %v364, %v365
  %vm367 = vcmp.lt.s32.totalorder %v348, 1
  %vm368 = vcmp.lt.s32.totalorder %v348, 2
  %vm369 = vcmp.lt.s32.totalorder %v348, 3
  %vm370 = vcmp.lt.s32.totalorder %v348, 4
  %v371 = vsel %vm367, %v351, %v354
  %v372 = vsel %vm370, %v360, 2102212464
  %v373 = vsel %vm369, %v357, %v372
  %v374 = vsel %vm368, %v371, %v373
  %v375 = vsel %vm367, %v354, %v357
  %v376 = vsel %vm370, %v363, 920167782
  %v377 = vsel %vm369, %v360, %v376
  %v378 = vsel %vm368, %v375, %v377
  %v379 = vsel %vm367, %v357, %v360
  %v380 = vsel %vm370, %v366, 1326507024
  %v381 = vsel %vm369, %v363, %v380
  %v382 = vsel %vm368, %v379, %v381
  %v383 = vshll.u32 %v343, 8
  %v384 = vmul.u32.u64.compose %v383, %v382
  %v385 = vextract.low.u32 %v384
  %v386 = vextract.high.u32 %v384
  %v387 = vmul.u32.u64.compose %v383, %v378
  %v388 = vextract.low.u32 %v387
  %v389 = vextract.high.u32 %v387
  %v390 = vmul.u32 %v383, %v374
  %v391 = vadd.s32 %v386, %v388
  %vm392 = vc.u32 %v386, %v388
  %v393 = vadd.s32 %v389, 1
  %v394 = vsel %vm392, %v393, %v389
  %v395 = vadd.s32 %v390, %v394
  %v396 = vadd.s32 %v395, 536870912
  %v397 = vshrl.u32 %v396, 30
  %v398 = vshll.u32 %v397, 30
  %v399 = vsub.s32 %v395, %v398
  %vm400 = vcmp.lt.s32.totalorder %v399, 0
  %v401 = vsub.s32 0, %v399
  %v402 = vsel %vm400, %v401, %v399
  %v403 = vclz %v402
  %v404 = vsub.s32 %v403, 2
  %vm405 = vcmp.gt.s32.totalorder 0, %v404
  %v406 = vsel %vm405, 0, %v404
  %v407 = vsub.s32 32, %v406
  %v408 = vshll.u32 %v399, %v406
  %v409 = vshrl.u32 %v391, %v407
  %v410 = vor.u32 %v408, %v409
  %v411 = vsub.s32 4294967266, %v406
  %v412 = vadd.s32 %v411, 127
  %v413 = vshll.u32 %v412, 23
  %v414 = vor.u32 4788187, %v413
  %v415 = vand.u32 2147483647, %v414
  %v417 = vcvt.s32.f32 %v410
  %v418 = vmul.f32 %v417, %v415
  %v419 = vxor.u32 %v418, 2147483648
  %v420 = vsel %vm337, %v419, %v418
  %v421 = vsub.s32 4, %v397
  %v422 = vsel %vm337, %v421, %v397
  %v423 = vsel %vm336, %v121, %v420
  %v424 = vsel %vm336, 0, %v422
  %v425 = vcosq.f32.pop %v423
  %v426 = vsinq.f32.pop %v423
  %vm427 = vweird.f32 %v121
  %v428 = vand.u32 %v424, 3
  %vm429 = vcmp.lt.s32.totalorder %v428, 2
  %vm430 = vcmp.eq.s32.totalorder %v428, 0
  %v431 = vxor.u32 %v426, 2147483648
  %v432 = vsel %vm430, %v425, %v431
  %vm433 = vcmp.eq.s32.totalorder %v428, 2
  %v434 = vxor.u32 %v425, 2147483648
  %v435 = vsel %vm433, %v434, %v426
  %v436 = vsel %vm429, %v432, %v435
  %v437 = vsel %vm427, nan, %v436
  %v438 = vand.u32 2147483647, %v122
  %vm439 = vcmp.le.f32.partialorder %v438, 0.7853982
  %vm440 = vcmp.lt.s32.totalorder %v122, 0
  %v441 = vand.u32 %v122, 2139095040
  %v442 = vshrl.u32 %v441, 23
  %v443 = vsub.s32 %v442, 127
  %v444 = vand.u32 2147483647, %v122
  %v445 = vand.u32 %v444, 8388607
  %v446 = vor.u32 %v445, 8388608
  %v447 = vsub.s32 0, %v446
  %v448 = vadd.s32 %v443, 1
  %vm449 = vcmp.gt.s32.totalorder %v448, 0
  %v450 = vsel %vm449, %v448, 0
  %v451 = vshrl.u32 %v450, 5
  %v452 = vand.u32 %v450, 31
  %v453 = vsub.s32 32, %v452
  %v454 = vshrl.u32 683565275, %v453
  %v455 = vshll.u32 683565275, %v452
  %v456 = vshrl.u32 2475754826, %v453
  %v457 = vor.u32 %v455, %v456
  %v458 = vshll.u32 2475754826, %v452
  %v459 = vshrl.u32 2131351028, %v453
  %v460 = vor.u32 %v458, %v459
  %v461 = vshll.u32 2131351028, %v452
  %v462 = vshrl.u32 2102212464, %v453
  %v463 = vor.u32 %v461, %v462
  %v464 = vshll.u32 2102212464, %v452
  %v465 = vshrl.u32 920167782, %v453
  %v466 = vor.u32 %v464, %v465
  %v467 = vshll.u32 920167782, %v452
  %v468 = vshrl.u32 1326507024, %v453
  %v469 = vor.u32 %v467, %v468
  %vm470 = vcmp.lt.s32.totalorder %v451, 1
  %vm471 = vcmp.lt.s32.totalorder %v451, 2
  %vm472 = vcmp.lt.s32.totalorder %v451, 3
  %vm473 = vcmp.lt.s32.totalorder %v451, 4
  %v474 = vsel %vm470, %v454, %v457
  %v475 = vsel %vm473, %v463, 2102212464
  %v476 = vsel %vm472, %v460, %v475
  %v477 = vsel %vm471, %v474, %v476
  %v478 = vsel %vm470, %v457, %v460
  %v479 = vsel %vm473, %v466, 920167782
  %v480 = vsel %vm472, %v463, %v479
  %v481 = vsel %vm471, %v478, %v480
  %v482 = vsel %vm470, %v460, %v463
  %v483 = vsel %vm473, %v469, 1326507024
  %v484 = vsel %vm472, %v466, %v483
  %v485 = vsel %vm471, %v482, %v484
  %v486 = vshll.u32 %v446, 8
  %v487 = vmul.u32.u64.compose %v486, %v485
  %v488 = vextract.low.u32 %v487
  %v489 = vextract.high.u32 %v487
  %v490 = vmul.u32.u64.compose %v486, %v481
  %v491 = vextract.low.u32 %v490
  %v492 = vextract.high.u32 %v490
  %v493 = vmul.u32 %v486, %v477
  %v494 = vadd.s32 %v489, %v491
  %vm495 = vc.u32 %v489, %v491
  %v496 = vadd.s32 %v492, 1
  %v497 = vsel %vm495, %v496, %v492
  %v498 = vadd.s32 %v493, %v497
  %v499 = vadd.s32 %v498, 536870912
  %v500 = vshrl.u32 %v499, 30
  %v501 = vshll.u32 %v500, 30
  %v502 = vsub.s32 %v498, %v501
  %vm503 = vcmp.lt.s32.totalorder %v502, 0
  %v504 = vsub.s32 0, %v502
  %v505 = vsel %vm503, %v504, %v502
  %v506 = vclz %v505
  %v507 = vsub.s32 %v506, 2
  %vm508 = vcmp.gt.s32.totalorder 0, %v507
  %v509 = vsel %vm508, 0, %v507
  %v510 = vsub.s32 32, %v509
  %v511 = vshll.u32 %v502, %v509
  %v512 = vshrl.u32 %v494, %v510
  %v513 = vor.u32 %v511, %v512
  %v514 = vsub.s32 4294967266, %v509
  %v515 = vadd.s32 %v514, 127
  %v516 = vshll.u32 %v515, 23
  %v517 = vor.u32 4788187, %v516
  %v518 = vand.u32 2147483647, %v517
  %v520 = vcvt.s32.f32 %v513
  %v521 = vmul.f32 %v520, %v518
  %v522 = vxor.u32 %v521, 2147483648
  %v523 = vsel %vm440, %v522, %v521
  %v524 = vsub.s32 4, %v500
  %v525 = vsel %vm440, %v524, %v500
  %v526 = vsel %vm439, %v122, %v523
  %v527 = vsel %vm439, 0, %v525
  %v528 = vcosq.f32.pop %v526
  %v529 = vsinq.f32.pop %v526
  %vm530 = vweird.f32 %v122
  %v531 = vand.u32 %v527, 3
  %vm532 = vcmp.lt.s32.totalorder %v531, 2
  %vm533 = vcmp.eq.s32.totalorder %v531, 0
  %v534 = vxor.u32 %v529, 2147483648
  %v535 = vsel %vm533, %v528, %v534
  %vm536 = vcmp.eq.s32.totalorder %v531, 2
  %v537 = vxor.u32 %v528, 2147483648
  %v538 = vsel %vm536, %v537, %v529
  %v539 = vsel %vm532, %v535, %v538
  %v540 = vsel %vm530, nan, %v539
  %v541 = vsel %vm126, 1, 0
  %vm542 = vcmp.eq.s32.totalorder %v541, 1
  %v543 = vsel %vm542, %v230, %v437
  %v544 = vsel %vm542, %v334, %v540
  %v545 = vsel %vm125, 1, 0
  %vm546 = vcmp.eq.s32.totalorder %v545, 1
  %v547 = vsel %vm546, 0.0, %v543
  %v548 = vsel %vm546, 0.0, %v544
  %v549 = vadd.f32 %v100, %v547
  %v550 = vadd.f32 %v101, %v548
  %v551 = vld [vmem:[%s3] sm:$0x3]
  %v552 = vcvt.s32.f32 %v124
  %v555 = vunpack.c.l.s4 1966171168
  %v556 = vunpack.c.0.s8 %v555
  %v557 = vlaneseq
  %v558 = vshrl.u32 %v557, 7
  %v559 = vsub.s32 %v556, %v558
  %v560 = vrot.slane %v551, %v559
  %v561 = vcombine.high %v560, %v560
  %v563 = vunpack.c.l.s4 1966171168
  %v564 = vunpack.c.0.s8 %v563
  %v565 = vlaneseq
  %v566 = vshrl.u32 %v565, 7
  %v567 = vsub.s32 %v564, %v566
  %v568 = vrot.slane %v560, %v567
  %v570 = vunpack.c.l.s4 1966171168
  %v571 = vunpack.c.0.s8 %v570
  %v572 = vlaneseq
  %v573 = vshrl.u32 %v572, 7
  %v574 = vsub.s32 %v571, %v573
  %v575 = vrot.slane %v561, %v574
  %v576 = vlaneseq
  %v577 = vshrl.u32 %v576, 7
  %v578 = vsub.s32 0, %v577
  %v579 = vrot.slane %v568, %v578
  %v580 = vlaneseq
  %v581 = vshrl.u32 %v580, 7
  %v582 = vsub.s32 0, %v581
  %v583 = vrot.slane %v575, %v582
  %584 = vset.pattern.permute.xlu0 0
  %585 = vperm.xlu0 %584, %v579
  %v586 = vpop.permute.xlu0 %585
  %588 = vset.pattern.permute.xlu0 0
  %589 = vperm.xlu0 %588, %v583
  %v590 = vpop.permute.xlu0 %589
  %vm592 = vcmp.ge.f32.partialorder %v552, %v586
  %vm593 = vcmp.ge.f32.partialorder %v552, %v590
  %v594 = vsel %vm592, -1e+09, 0.0
  %v595 = vsel %vm593, -1e+09, 0.0
  %v596 = vlaneseq
  %v597 = vshrl.u32 %v596, 7
  %v598 = vcvt.s32.f32 %v597
  %vm599 = vcmp.lt.f32.partialorder %v598, %v586
  %vm600 = vcmp.lt.f32.partialorder %v598, %v590
  %v601 = vsel %vm599, 1, 0
  %v602 = vsel %vm600, 1, 0
  %v603 = vcvt.s32.f32 %v601
  %v604 = vcvt.s32.f32 %v602
  %v605 = vld [vmem:[%s12] sm:$0xff]
  %v606 = vpack.c.bf16 %v550, %v549
  %v607 = vld [vmem:[%s8] sm:$0xf]
  %v608 = vld [vmem:[%s8 + $0x4] sm:$0xf]
  %v609 = vld [vmem:[%s8 + $0x8] sm:$0xf]
  %v610 = vlaneseq
  %v611 = vshrl.u32 %v610, 7
  %v612 = vsub.s32 0, %v611
  %v613 = vrot.slane %v605, %v612
  %v617 = vunpack.c.l.b16 %v607
  %v618 = vunpack.c.l.b16 %v608
  %v619 = vunpack.c.l.b16 %v609
  %v620 = vpack.c.b16 %v618, %v617
  %v621 = vpack.c.b16 %v619, %v619
  %vm623 = vcmask 195584
  %v625 = vsel %vm623, %v606, 0
  %vm627 = vcmask 1043456
  %v629 = vsel %vm627, %v621, 0
  %631 = vmatprep.subr.bf16.mxu0 0
  %632 = vmatpush1.bf16.msra.mxu0 0
  %633 = vmatprep.subr.bf16.mxu0 0
  %634 = vmatpush1.bf16.msra.mxu0 0
  %635 = vmatprep.subr.bf16.mxu0 0
  %636 = vmatpush1.bf16.msra.mxu0 0
  %637 = vmatprep.subr.bf16.mxu0 0
  %638 = vmatpush1.bf16.msra.mxu0 0
  %639 = vmatprep.subr.bf16.mxu0 0
  %640 = vmatpush1.bf16.msra.mxu0 0
  %641 = vmatprep.subr.bf16.mxu0 0
  %642 = vmatpush1.bf16.msra.mxu0 0
  %643 = vmatprep.subr.bf16.mxu0 0
  %644 = vmatpush1.bf16.msra.mxu0 %v629
  %645 = vmatprep.subr.bf16.mxu0 0
  %646 = vmatpush1.bf16.msra.mxu0 %v620
  %647 = vmatprep.subr.bf16.mxu0 0
  %648 = vmatpush2.bf16.msra.mxu0 0
  %649 = vmatprep.subr.bf16.mxu0 0
  %650 = vmatpush2.bf16.msra.mxu0 0
  %651 = vmatprep.subr.bf16.mxu0 0
  %652 = vmatpush2.bf16.msra.mxu0 0
  %653 = vmatprep.subr.bf16.mxu0 0
  %654 = vmatpush2.bf16.msra.mxu0 0
  %655 = vmatprep.subr.bf16.mxu0 0
  %656 = vmatpush2.bf16.msra.mxu0 0
  %657 = vmatprep.subr.bf16.mxu0 0
  %658 = vmatpush2.bf16.msra.mxu0 0
  %659 = vmatprep.subr.bf16.mxu0 0
  %660 = vmatpush2.bf16.msra.mxu0 0
  %661 = vmatprep.subr.bf16.mxu0 0
  %662 = vmatpush2.bf16.msra.mxu0 0
  %663 = vmatprep.mubr.bf16.mxu0 0
  %664 = vmatmul.mubr.bf16.gmra.mxu0 %v625
  %v665 = vpop.f32.mrf.mxu0
  %v666 = vadd.f32 %v613, %v665
  %v667 = vpop.f32.mrf.mxu0
  %v668 = vpop.f32.mrf.mxu0
  %v669 = vadd.f32 %v613, %v668
  %v670 = vpop.f32.mrf.mxu0
  %671 = vdwg.mxu0
  %v672 = vpack.c.bf16 %v666, %v666
  %v673 = vpack.c.bf16 %v669, %v669
  %675 = vrot.lane.b32.xlu0 %v672, 104
  %v676 = vpop.permute.xlu0 %675
  %vm677 = vcmask 97280
  %v679 = vsel %vm677, %v672, 0
  %v682 = vsel %vm677, %v676, 0
  %684 = vmatprep.subr.bf16.mxu0 0
  %685 = vmatpush1.bf16.xpose.msra.mxu0 0
  %686 = vmatprep.subr.bf16.mxu0 0
  %687 = vmatpush1.bf16.xpose.msra.mxu0 0
  %688 = vmatprep.subr.bf16.mxu0 0
  %689 = vmatpush1.bf16.xpose.msra.mxu0 0
  %690 = vmatprep.subr.bf16.mxu0 0
  %691 = vmatpush1.bf16.xpose.msra.mxu0 0
  %692 = vmatprep.subr.bf16.mxu0 0
  %693 = vmatpush1.bf16.xpose.msra.mxu0 0
  %694 = vmatprep.subr.bf16.mxu0 0
  %695 = vmatpush1.bf16.xpose.msra.mxu0 0
  %696 = vmatprep.subr.bf16.mxu0 0
  %697 = vmatpush1.bf16.xpose.msra.mxu0 0
  %698 = vmatprep.subr.bf16.mxu0 0
  %699 = vmatpush1.bf16.xpose.msra.mxu0 %v682
  %700 = vmatprep.subr.bf16.mxu0 0
  %701 = vmatpush2.bf16.xpose.msra.mxu0 0
  %702 = vmatprep.subr.bf16.mxu0 0
  %703 = vmatpush2.bf16.xpose.msra.mxu0 0
  %704 = vmatprep.subr.bf16.mxu0 0
  %705 = vmatpush2.bf16.xpose.msra.mxu0 0
  %706 = vmatprep.subr.bf16.mxu0 0
  %707 = vmatpush2.bf16.xpose.msra.mxu0 0
  %708 = vmatprep.subr.bf16.mxu0 0
  %709 = vmatpush2.bf16.xpose.msra.mxu0 0
  %710 = vmatprep.subr.bf16.mxu0 0
  %711 = vmatpush2.bf16.xpose.msra.mxu0 0
  %712 = vmatprep.subr.bf16.mxu0 0
  %713 = vmatpush2.bf16.xpose.msra.mxu0 0
  %714 = vmatprep.subr.bf16.mxu0 0
  %715 = vmatpush2.bf16.xpose.msra.mxu0 0
  %716 = vmatprep.mubr.bf16.mxu0 0
  %717 = vmatmul.mubr.bf16.gmra.mxu0 %v679
  %v718 = vpop.f32.mrf.mxu0
  %v719 = vadd.f32 %v594, %v718
  %v720 = vpop.f32.mrf.mxu0
  %v721 = vpop.f32.mrf.mxu0
  %v722 = vpop.f32.mrf.mxu0
  %723 = vdwg.mxu0
  %725 = vrot.lane.b32.xlu0 %v673, 104
  %v726 = vpop.permute.xlu0 %725
  %v728 = vsel %vm677, %v673, 0
  %v731 = vsel %vm677, %v726, 0
  %733 = vmatprep.subr.bf16.mxu0 0
  %734 = vmatpush1.bf16.xpose.msra.mxu0 0
  %735 = vmatprep.subr.bf16.mxu0 0
  %736 = vmatpush1.bf16.xpose.msra.mxu0 0
  %737 = vmatprep.subr.bf16.mxu0 0
  %738 = vmatpush1.bf16.xpose.msra.mxu0 0
  %739 = vmatprep.subr.bf16.mxu0 0
  %740 = vmatpush1.bf16.xpose.msra.mxu0 0
  %741 = vmatprep.subr.bf16.mxu0 0
  %742 = vmatpush1.bf16.xpose.msra.mxu0 0
  %743 = vmatprep.subr.bf16.mxu0 0
  %744 = vmatpush1.bf16.xpose.msra.mxu0 0
  %745 = vmatprep.subr.bf16.mxu0 0
  %746 = vmatpush1.bf16.xpose.msra.mxu0 0
  %747 = vmatprep.subr.bf16.mxu0 0
  %748 = vmatpush1.bf16.xpose.msra.mxu0 %v731
  %749 = vmatprep.subr.bf16.mxu0 0
  %750 = vmatpush2.bf16.xpose.msra.mxu0 0
  %751 = vmatprep.subr.bf16.mxu0 0
  %752 = vmatpush2.bf16.xpose.msra.mxu0 0
  %753 = vmatprep.subr.bf16.mxu0 0
  %754 = vmatpush2.bf16.xpose.msra.mxu0 0
  %755 = vmatprep.subr.bf16.mxu0 0
  %756 = vmatpush2.bf16.xpose.msra.mxu0 0
  %757 = vmatprep.subr.bf16.mxu0 0
  %758 = vmatpush2.bf16.xpose.msra.mxu0 0
  %759 = vmatprep.subr.bf16.mxu0 0
  %760 = vmatpush2.bf16.xpose.msra.mxu0 0
  %761 = vmatprep.subr.bf16.mxu0 0
  %762 = vmatpush2.bf16.xpose.msra.mxu0 0
  %763 = vmatprep.subr.bf16.mxu0 0
  %764 = vmatpush2.bf16.xpose.msra.mxu0 0
  %765 = vmatprep.mubr.bf16.mxu0 0
  %766 = vmatmul.mubr.bf16.gmra.mxu0 %v728
  %v767 = vpop.f32.mrf.mxu0
  %v768 = vadd.f32 %v595, %v767
  %v769 = vpop.f32.mrf.mxu0
  %v770 = vpop.f32.mrf.mxu0
  %v771 = vpop.f32.mrf.mxu0
  %772 = vdwg.mxu0
  %vm773 = vcmask 64512
  %v774 = vsel %vm773, %v719, -inf
  %775 = vmax.xlane.f32.xlu0 %v774
  %v776 = vpop.xlane.xlu0 %775
  %v777 = vsel %vm773, %v768, -inf
  %778 = vmax.xlane.f32.xlu0 %v777
  %v779 = vpop.xlane.xlu0 %778
  %v780 = vsub.f32 %v719, %v776
  %v781 = vsub.f32 %v768, %v779
  %v782 = vmul.f32 %v780, 1.442695
  %v783 = vpow.pop %v782
  %v784 = vmul.f32 %v781, 1.442695
  %v785 = vpow.pop %v784
  %v786 = vsel %vm773, %v783, 0.0
  %787 = vadd.xlane.f32.xlu0 %v786
  %v788 = vpop.xlane.xlu0 %787
  %v789 = vsel %vm773, %v785, 0.0
  %790 = vadd.xlane.f32.xlu0 %v789
  %v791 = vpop.xlane.xlu0 %790
  %v792 = vrcp.pop %v788
  %v793 = vrcp.pop %v791
  %v794 = vmul.f32 %v783, %v792
  %v795 = vmul.f32 %v785, %v793
  %v796 = vpack.c.bf16 %v794, %v794
  %v797 = vpack.c.bf16 %v795, %v795
  %798 = vrot.lane.b32.xlu0 %v672, 80
  %v799 = vpop.permute.xlu0 %798
  %v801 = vsel %vm773, %v796, 0
  %v804 = vsel %vm627, %v799, 0
  %806 = vmatprep.subr.bf16.mxu0 0
  %807 = vmatpush1.bf16.msra.mxu0 0
  %808 = vmatprep.subr.bf16.mxu0 0
  %809 = vmatpush1.bf16.msra.mxu0 0
  %810 = vmatprep.subr.bf16.mxu0 0
  %811 = vmatpush1.bf16.msra.mxu0 0
  %812 = vmatprep.subr.bf16.mxu0 0
  %813 = vmatpush1.bf16.msra.mxu0 0
  %814 = vmatprep.subr.bf16.mxu0 0
  %815 = vmatpush1.bf16.msra.mxu0 0
  %816 = vmatprep.subr.bf16.mxu0 0
  %817 = vmatpush1.bf16.msra.mxu0 0
  %818 = vmatprep.subr.bf16.mxu0 0
  %819 = vmatpush1.bf16.msra.mxu0 0
  %820 = vmatprep.subr.bf16.mxu0 0
  %821 = vmatpush1.bf16.msra.mxu0 %v804
  %822 = vmatprep.subr.bf16.mxu0 0
  %823 = vmatpush2.bf16.msra.mxu0 0
  %824 = vmatprep.subr.bf16.mxu0 0
  %825 = vmatpush2.bf16.msra.mxu0 0
  %826 = vmatprep.subr.bf16.mxu0 0
  %827 = vmatpush2.bf16.msra.mxu0 0
  %828 = vmatprep.subr.bf16.mxu0 0
  %829 = vmatpush2.bf16.msra.mxu0 0
  %830 = vmatprep.subr.bf16.mxu0 0
  %831 = vmatpush2.bf16.msra.mxu0 0
  %832 = vmatprep.subr.bf16.mxu0 0
  %833 = vmatpush2.bf16.msra.mxu0 0
  %834 = vmatprep.subr.bf16.mxu0 0
  %835 = vmatpush2.bf16.msra.mxu0 0
  %836 = vmatprep.subr.bf16.mxu0 0
  %837 = vmatpush2.bf16.msra.mxu0 0
  %838 = vmatprep.mubr.bf16.mxu0 0
  %839 = vmatmul.mubr.bf16.gmra.mxu0 %v801
  %v840 = vpop.f32.mrf.mxu0
  %v841 = vadd.f32 0.0, %v840
  %v842 = vpop.f32.mrf.mxu0
  %v843 = vpop.f32.mrf.mxu0
  %v844 = vpop.f32.mrf.mxu0
  %845 = vdwg.mxu0
  %846 = vrot.lane.b32.xlu0 %v673, 80
  %v847 = vpop.permute.xlu0 %846
  %v849 = vsel %vm773, %v797, 0
  %v852 = vsel %vm627, %v847, 0
  %854 = vmatprep.subr.bf16.mxu0 0
  %855 = vmatpush1.bf16.msra.mxu0 0
  %856 = vmatprep.subr.bf16.mxu0 0
  %857 = vmatpush1.bf16.msra.mxu0 0
  %858 = vmatprep.subr.bf16.mxu0 0
  %859 = vmatpush1.bf16.msra.mxu0 0
  %860 = vmatprep.subr.bf16.mxu0 0
  %861 = vmatpush1.bf16.msra.mxu0 0
  %862 = vmatprep.subr.bf16.mxu0 0
  %863 = vmatpush1.bf16.msra.mxu0 0
  %864 = vmatprep.subr.bf16.mxu0 0
  %865 = vmatpush1.bf16.msra.mxu0 0
  %866 = vmatprep.subr.bf16.mxu0 0
  %867 = vmatpush1.bf16.msra.mxu0 0
  %868 = vmatprep.subr.bf16.mxu0 0
  %869 = vmatpush1.bf16.msra.mxu0 %v852
  %870 = vmatprep.subr.bf16.mxu0 0
  %871 = vmatpush2.bf16.msra.mxu0 0
  %872 = vmatprep.subr.bf16.mxu0 0
  %873 = vmatpush2.bf16.msra.mxu0 0
  %874 = vmatprep.subr.bf16.mxu0 0
  %875 = vmatpush2.bf16.msra.mxu0 0
  %876 = vmatprep.subr.bf16.mxu0 0
  %877 = vmatpush2.bf16.msra.mxu0 0
  %878 = vmatprep.subr.bf16.mxu0 0
  %879 = vmatpush2.bf16.msra.mxu0 0
  %880 = vmatprep.subr.bf16.mxu0 0
  %881 = vmatpush2.bf16.msra.mxu0 0
  %882 = vmatprep.subr.bf16.mxu0 0
  %883 = vmatpush2.bf16.msra.mxu0 0
  %884 = vmatprep.subr.bf16.mxu0 0
  %885 = vmatpush2.bf16.msra.mxu0 0
  %886 = vmatprep.mubr.bf16.mxu0 0
  %887 = vmatmul.mubr.bf16.gmra.mxu0 %v849
  %v888 = vpop.f32.mrf.mxu0
  %v889 = vadd.f32 0.0, %v888
  %v890 = vpop.f32.mrf.mxu0
  %v891 = vpop.f32.mrf.mxu0
  %v892 = vpop.f32.mrf.mxu0
  %893 = vdwg.mxu0
  %894 = vrot.lane.b32.xlu0 %v672, 116
  %v895 = vpop.permute.xlu0 %894
  %896 = vrot.lane.b32.xlu0 %v672, 92
  %v897 = vpop.permute.xlu0 %896
  %v899 = vsel %vm677, %v895, 0
  %v902 = vsel %vm677, %v897, 0
  %904 = vmatprep.subr.bf16.mxu0 0
  %905 = vmatpush1.bf16.xpose.msra.mxu0 0
  %906 = vmatprep.subr.bf16.mxu0 0
  %907 = vmatpush1.bf16.xpose.msra.mxu0 0
  %908 = vmatprep.subr.bf16.mxu0 0
  %909 = vmatpush1.bf16.xpose.msra.mxu0 0
  %910 = vmatprep.subr.bf16.mxu0 0
  %911 = vmatpush1.bf16.xpose.msra.mxu0 0
  %912 = vmatprep.subr.bf16.mxu0 0
  %913 = vmatpush1.bf16.xpose.msra.mxu0 0
  %914 = vmatprep.subr.bf16.mxu0 0
  %915 = vmatpush1.bf16.xpose.msra.mxu0 0
  %916 = vmatprep.subr.bf16.mxu0 0
  %917 = vmatpush1.bf16.xpose.msra.mxu0 0
  %918 = vmatprep.subr.bf16.mxu0 0
  %919 = vmatpush1.bf16.xpose.msra.mxu0 %v902
  %920 = vmatprep.subr.bf16.mxu0 0
  %921 = vmatpush2.bf16.xpose.msra.mxu0 0
  %922 = vmatprep.subr.bf16.mxu0 0
  %923 = vmatpush2.bf16.xpose.msra.mxu0 0
  %924 = vmatprep.subr.bf16.mxu0 0
  %925 = vmatpush2.bf16.xpose.msra.mxu0 0
  %926 = vmatprep.subr.bf16.mxu0 0
  %927 = vmatpush2.bf16.xpose.msra.mxu0 0
  %928 = vmatprep.subr.bf16.mxu0 0
  %929 = vmatpush2.bf16.xpose.msra.mxu0 0
  %930 = vmatprep.subr.bf16.mxu0 0
  %931 = vmatpush2.bf16.xpose.msra.mxu0 0
  %932 = vmatprep.subr.bf16.mxu0 0
  %933 = vmatpush2.bf16.xpose.msra.mxu0 0
  %934 = vmatprep.subr.bf16.mxu0 0
  %935 = vmatpush2.bf16.xpose.msra.mxu0 0
  %936 = vmatprep.mubr.bf16.mxu0 0
  %937 = vmatmul.mubr.bf16.gmra.mxu0 %v899
  %v938 = vpop.f32.mrf.mxu0
  %v939 = vadd.f32 %v594, %v938
  %v940 = vpop.f32.mrf.mxu0
  %v941 = vpop.f32.mrf.mxu0
  %v942 = vpop.f32.mrf.mxu0
  %943 = vdwg.mxu0
  %944 = vrot.lane.b32.xlu0 %v673, 116
  %v945 = vpop.permute.xlu0 %944
  %946 = vrot.lane.b32.xlu0 %v673, 92
  %v947 = vpop.permute.xlu0 %946
  %v949 = vsel %vm677, %v945, 0
  %v952 = vsel %vm677, %v947, 0
  %954 = vmatprep.subr.bf16.mxu0 0
  %955 = vmatpush1.bf16.xpose.msra.mxu0 0
  %956 = vmatprep.subr.bf16.mxu0 0
  %957 = vmatpush1.bf16.xpose.msra.mxu0 0
  %958 = vmatprep.subr.bf16.mxu0 0
  %959 = vmatpush1.bf16.xpose.msra.mxu0 0
  %960 = vmatprep.subr.bf16.mxu0 0
  %961 = vmatpush1.bf16.xpose.msra.mxu0 0
  %962 = vmatprep.subr.bf16.mxu0 0
  %963 = vmatpush1.bf16.xpose.msra.mxu0 0
  %964 = vmatprep.subr.bf16.mxu0 0
  %965 = vmatpush1.bf16.xpose.msra.mxu0 0
  %966 = vmatprep.subr.bf16.mxu0 0
  %967 = vmatpush1.bf16.xpose.msra.mxu0 0
  %968 = vmatprep.subr.bf16.mxu0 0
  %969 = vmatpush1.bf16.xpose.msra.mxu0 %v952
  %970 = vmatprep.subr.bf16.mxu0 0
  %971 = vmatpush2.bf16.xpose.msra.mxu0 0
  %972 = vmatprep.subr.bf16.mxu0 0
  %973 = vmatpush2.bf16.xpose.msra.mxu0 0
  %974 = vmatprep.subr.bf16.mxu0 0
  %975 = vmatpush2.bf16.xpose.msra.mxu0 0
  %976 = vmatprep.subr.bf16.mxu0 0
  %977 = vmatpush2.bf16.xpose.msra.mxu0 0
  %978 = vmatprep.subr.bf16.mxu0 0
  %979 = vmatpush2.bf16.xpose.msra.mxu0 0
  %980 = vmatprep.subr.bf16.mxu0 0
  %981 = vmatpush2.bf16.xpose.msra.mxu0 0
  %982 = vmatprep.subr.bf16.mxu0 0
  %983 = vmatpush2.bf16.xpose.msra.mxu0 0
  %984 = vmatprep.subr.bf16.mxu0 0
  %985 = vmatpush2.bf16.xpose.msra.mxu0 0
  %986 = vmatprep.mubr.bf16.mxu0 0
  %987 = vmatmul.mubr.bf16.gmra.mxu0 %v949
  %v988 = vpop.f32.mrf.mxu0
  %v989 = vadd.f32 %v595, %v988
  %v990 = vpop.f32.mrf.mxu0
  %v991 = vpop.f32.mrf.mxu0
  %v992 = vpop.f32.mrf.mxu0
  %993 = vdwg.mxu0
  %v994 = vsel %vm773, %v939, -inf
  %995 = vmax.xlane.f32.xlu0 %v994
  %v996 = vpop.xlane.xlu0 %995
  %v997 = vsel %vm773, %v989, -inf
  %998 = vmax.xlane.f32.xlu0 %v997
  %v999 = vpop.xlane.xlu0 %998
  %v1000 = vsub.f32 %v939, %v996
  %v1001 = vsub.f32 %v989, %v999
  %v1002 = vmul.f32 %v1000, 1.442695
  %v1003 = vpow.pop %v1002
  %v1004 = vmul.f32 %v1001, 1.442695
  %v1005 = vpow.pop %v1004
  %v1006 = vsel %vm773, %v1003, 0.0
  %1007 = vadd.xlane.f32.xlu0 %v1006
  %v1008 = vpop.xlane.xlu0 %1007
  %v1009 = vsel %vm773, %v1005, 0.0
  %1010 = vadd.xlane.f32.xlu0 %v1009
  %v1011 = vpop.xlane.xlu0 %1010
  %v1012 = vrcp.pop %v1008
  %v1013 = vrcp.pop %v1011
  %v1014 = vmul.f32 %v1003, %v1012
  %v1015 = vmul.f32 %v1005, %v1013
  %v1016 = vpack.c.bf16 %v1014, %v1014
  %v1017 = vpack.c.bf16 %v1015, %v1015
  %1018 = vrot.lane.b32.xlu0 %v672, 68
  %v1019 = vpop.permute.xlu0 %1018
  %v1021 = vsel %vm773, %v1016, 0
  %v1024 = vsel %vm627, %v1019, 0
  %1026 = vmatprep.subr.bf16.mxu0 0
  %1027 = vmatpush1.bf16.msra.mxu0 0
  %1028 = vmatprep.subr.bf16.mxu0 0
  %1029 = vmatpush1.bf16.msra.mxu0 0
  %1030 = vmatprep.subr.bf16.mxu0 0
  %1031 = vmatpush1.bf16.msra.mxu0 0
  %1032 = vmatprep.subr.bf16.mxu0 0
  %1033 = vmatpush1.bf16.msra.mxu0 0
  %1034 = vmatprep.subr.bf16.mxu0 0
  %1035 = vmatpush1.bf16.msra.mxu0 0
  %1036 = vmatprep.subr.bf16.mxu0 0
  %1037 = vmatpush1.bf16.msra.mxu0 0
  %1038 = vmatprep.subr.bf16.mxu0 0
  %1039 = vmatpush1.bf16.msra.mxu0 0
  %1040 = vmatprep.subr.bf16.mxu0 0
  %1041 = vmatpush1.bf16.msra.mxu0 %v1024
  %1042 = vmatprep.subr.bf16.mxu0 0
  %1043 = vmatpush2.bf16.msra.mxu0 0
  %1044 = vmatprep.subr.bf16.mxu0 0
  %1045 = vmatpush2.bf16.msra.mxu0 0
  %1046 = vmatprep.subr.bf16.mxu0 0
  %1047 = vmatpush2.bf16.msra.mxu0 0
  %1048 = vmatprep.subr.bf16.mxu0 0
  %1049 = vmatpush2.bf16.msra.mxu0 0
  %1050 = vmatprep.subr.bf16.mxu0 0
  %1051 = vmatpush2.bf16.msra.mxu0 0
  %1052 = vmatprep.subr.bf16.mxu0 0
  %1053 = vmatpush2.bf16.msra.mxu0 0
  %1054 = vmatprep.subr.bf16.mxu0 0
  %1055 = vmatpush2.bf16.msra.mxu0 0
  %1056 = vmatprep.subr.bf16.mxu0 0
  %1057 = vmatpush2.bf16.msra.mxu0 0
  %1058 = vmatprep.mubr.bf16.mxu0 0
  %1059 = vmatmul.mubr.bf16.gmra.mxu0 %v1021
  %v1060 = vpop.f32.mrf.mxu0
  %v1061 = vadd.f32 0.0, %v1060
  %v1062 = vpop.f32.mrf.mxu0
  %v1063 = vpop.f32.mrf.mxu0
  %v1064 = vpop.f32.mrf.mxu0
  %1065 = vdwg.mxu0
  %1066 = vrot.lane.b32.xlu0 %v673, 68
  %v1067 = vpop.permute.xlu0 %1066
  %v1069 = vsel %vm773, %v1017, 0
  %v1072 = vsel %vm627, %v1067, 0
  %1074 = vmatprep.subr.bf16.mxu0 0
  %1075 = vmatpush1.bf16.msra.mxu0 0
  %1076 = vmatprep.subr.bf16.mxu0 0
  %1077 = vmatpush1.bf16.msra.mxu0 0
  %1078 = vmatprep.subr.bf16.mxu0 0
  %1079 = vmatpush1.bf16.msra.mxu0 0
  %1080 = vmatprep.subr.bf16.mxu0 0
  %1081 = vmatpush1.bf16.msra.mxu0 0
  %1082 = vmatprep.subr.bf16.mxu0 0
  %1083 = vmatpush1.bf16.msra.mxu0 0
  %1084 = vmatprep.subr.bf16.mxu0 0
  %1085 = vmatpush1.bf16.msra.mxu0 0
  %1086 = vmatprep.subr.bf16.mxu0 0
  %1087 = vmatpush1.bf16.msra.mxu0 0
  %1088 = vmatprep.subr.bf16.mxu0 0
  %1089 = vmatpush1.bf16.msra.mxu0 %v1072
  %1090 = vmatprep.subr.bf16.mxu0 0
  %1091 = vmatpush2.bf16.msra.mxu0 0
  %1092 = vmatprep.subr.bf16.mxu0 0
  %1093 = vmatpush2.bf16.msra.mxu0 0
  %1094 = vmatprep.subr.bf16.mxu0 0
  %1095 = vmatpush2.bf16.msra.mxu0 0
  %1096 = vmatprep.subr.bf16.mxu0 0
  %1097 = vmatpush2.bf16.msra.mxu0 0
  %1098 = vmatprep.subr.bf16.mxu0 0
  %1099 = vmatpush2.bf16.msra.mxu0 0
  %1100 = vmatprep.subr.bf16.mxu0 0
  %1101 = vmatpush2.bf16.msra.mxu0 0
  %1102 = vmatprep.subr.bf16.mxu0 0
  %1103 = vmatpush2.bf16.msra.mxu0 0
  %1104 = vmatprep.subr.bf16.mxu0 0
  %1105 = vmatpush2.bf16.msra.mxu0 0
  %1106 = vmatprep.mubr.bf16.mxu0 0
  %1107 = vmatmul.mubr.bf16.gmra.mxu0 %v1069
  %v1108 = vpop.f32.mrf.mxu0
  %v1109 = vadd.f32 0.0, %v1108
  %v1110 = vpop.f32.mrf.mxu0
  %v1111 = vpop.f32.mrf.mxu0
  %v1112 = vpop.f32.mrf.mxu0
  %1113 = vdwg.mxu0
  %1116 = vrot.lane.b32.xlu0 %v1061, 12
  %v1117 = vpop.permute.xlu0 %1116
  %1118 = vrot.lane.b32.xlu0 %v1109, 12
  %v1119 = vpop.permute.xlu0 %1118
  %v1122 = vsel %vm677, %v841, %v1117
  %v1123 = vsel %vm677, %v889, %v1119
  %v1124 = vpack.c.bf16 %v1123, %v1122
  %v1125 = vld [vmem:[%s9] sm:$0xf]
  %v1126 = vld [vmem:[%s9 + $0x4] sm:$0xf]
  %v1127 = vld [vmem:[%s9 + $0x8] sm:$0xf]
  %v1128 = vlaneseq
  %v1129 = vshrl.u32 %v1128, 7
  %v1130 = vsub.s32 1, %v1129
  %v1131 = vrot.slane %v605, %v1130
  %v1135 = vunpack.c.l.b16 %v1125
  %v1136 = vunpack.c.l.b16 %v1126
  %v1137 = vunpack.c.l.b16 %v1127
  %v1138 = vpack.c.b16 %v1136, %v1135
  %v1139 = vpack.c.b16 %v1137, %v1137
  %v1142 = vsel %vm623, %v1124, 0
  %v1145 = vsel %vm627, %v1139, 0
  %1147 = vmatprep.subr.bf16.mxu0 0
  %1148 = vmatpush1.bf16.msra.mxu0 0
  %1149 = vmatprep.subr.bf16.mxu0 0
  %1150 = vmatpush1.bf16.msra.mxu0 0
  %1151 = vmatprep.subr.bf16.mxu0 0
  %1152 = vmatpush1.bf16.msra.mxu0 0
  %1153 = vmatprep.subr.bf16.mxu0 0
  %1154 = vmatpush1.bf16.msra.mxu0 0
  %1155 = vmatprep.subr.bf16.mxu0 0
  %1156 = vmatpush1.bf16.msra.mxu0 0
  %1157 = vmatprep.subr.bf16.mxu0 0
  %1158 = vmatpush1.bf16.msra.mxu0 0
  %1159 = vmatprep.subr.bf16.mxu0 0
  %1160 = vmatpush1.bf16.msra.mxu0 %v1145
  %1161 = vmatprep.subr.bf16.mxu0 0
  %1162 = vmatpush1.bf16.msra.mxu0 %v1138
  %1163 = vmatprep.subr.bf16.mxu0 0
  %1164 = vmatpush2.bf16.msra.mxu0 0
  %1165 = vmatprep.subr.bf16.mxu0 0
  %1166 = vmatpush2.bf16.msra.mxu0 0
  %1167 = vmatprep.subr.bf16.mxu0 0
  %1168 = vmatpush2.bf16.msra.mxu0 0
  %1169 = vmatprep.subr.bf16.mxu0 0
  %1170 = vmatpush2.bf16.msra.mxu0 0
  %1171 = vmatprep.subr.bf16.mxu0 0
  %1172 = vmatpush2.bf16.msra.mxu0 0
  %1173 = vmatprep.subr.bf16.mxu0 0
  %1174 = vmatpush2.bf16.msra.mxu0 0
  %1175 = vmatprep.subr.bf16.mxu0 0
  %1176 = vmatpush2.bf16.msra.mxu0 0
  %1177 = vmatprep.subr.bf16.mxu0 0
  %1178 = vmatpush2.bf16.msra.mxu0 0
  %1179 = vmatprep.mubr.bf16.mxu0 0
  %1180 = vmatmul.mubr.bf16.gmra.mxu0 %v1142
  %v1181 = vpop.f32.mrf.mxu0
  %v1182 = vadd.f32 %v1131, %v1181
  %v1183 = vpop.f32.mrf.mxu0
  %v1184 = vpop.f32.mrf.mxu0
  %v1185 = vadd.f32 %v1131, %v1184
  %v1186 = vpop.f32.mrf.mxu0
  %1187 = vdwg.mxu0
  %v1188 = vadd.f32 %v549, %v1182
  %v1189 = vadd.f32 %v550, %v1185
  %v1190 = vsel %vm623, %v1188, 0.0
  %1191 = vadd.xlane.f32.xlu0 %v1190
  %v1192 = vpop.xlane.xlu0 %1191
  %v1193 = vsel %vm623, %v1189, 0.0
  %1194 = vadd.xlane.f32.xlu0 %v1193
  %v1195 = vpop.xlane.xlu0 %1194
  %v1196 = vrcp.pop 24.0
  %v1197 = vmul.f32 %v1192, %v1196
  %v1198 = vmul.f32 %v1195, %v1196
  %v1199 = vmul.f32 %v1188, %v1188
  %v1200 = vmul.f32 %v1189, %v1189
  %v1201 = vsel %vm623, %v1199, 0.0
  %1202 = vadd.xlane.f32.xlu0 %v1201
  %v1203 = vpop.xlane.xlu0 %1202
  %v1204 = vsel %vm623, %v1200, 0.0
  %1205 = vadd.xlane.f32.xlu0 %v1204
  %v1206 = vpop.xlane.xlu0 %1205
  %v1207 = vmul.f32 %v1203, %v1196
  %v1208 = vmul.f32 %v1206, %v1196
  %v1209 = vsub.f32 %v1188, %v1197
  %v1210 = vsub.f32 %v1189, %v1198
  %v1211 = vmul.f32 %v1197, %v1197
  %v1212 = vmul.f32 %v1198, %v1198
  %v1213 = vsub.f32 %v1207, %v1211
  %v1214 = vsub.f32 %v1208, %v1212
  %v1215 = vadd.f32 %v1213, 1e-05
  %v1216 = vadd.f32 %v1214, 1e-05
  %v1217 = vrsqrt.pop %v1215
  %v1218 = vrsqrt.pop %v1216
  %v1219 = vmul.f32 %v1209, %v1217
  %v1220 = vmul.f32 %v1210, %v1218
  %v1221 = vlaneseq
  %v1222 = vshrl.u32 %v1221, 7
  %v1223 = vsub.s32 2, %v1222
  %v1224 = vrot.slane %v605, %v1223
  %v1225 = vmul.f32 %v1219, %v1224
  %v1226 = vmul.f32 %v1220, %v1224
  %v1227 = vlaneseq
  %v1228 = vshrl.u32 %v1227, 7
  %v1229 = vsub.s32 3, %v1228
  %v1230 = vrot.slane %v605, %v1229
  %v1231 = vadd.f32 %v1225, %v1230
  %v1232 = vadd.f32 %v1226, %v1230
  %v1233 = vpack.c.bf16 %v1232, %v1231
  %v1234 = vld [vmem:[%s10] sm:$0xf]
  %v1235 = vld [vmem:[%s10 + $0x4] sm:$0xf]
  %v1236 = vld [vmem:[%s10 + $0x8] sm:$0xf]
  %v1237 = vlaneseq
  %v1238 = vshrl.u32 %v1237, 7
  %v1239 = vsub.s32 4, %v1238
  %v1240 = vrot.slane %v605, %v1239
  %v1244 = vunpack.c.l.b16 %v1234
  %v1245 = vunpack.c.l.b16 %v1235
  %v1246 = vunpack.c.l.b16 %v1236
  %v1247 = vpack.c.b16 %v1245, %v1244
  %v1248 = vpack.c.b16 %v1246, %v1246
  %v1251 = vsel %vm623, %v1233, 0
  %v1254 = vsel %vm627, %v1248, 0
  %1256 = vmatprep.subr.bf16.mxu0 0
  %1257 = vmatpush1.bf16.msra.mxu0 0
  %1258 = vmatprep.subr.bf16.mxu0 0
  %1259 = vmatpush1.bf16.msra.mxu0 0
  %1260 = vmatprep.subr.bf16.mxu0 0
  %1261 = vmatpush1.bf16.msra.mxu0 0
  %1262 = vmatprep.subr.bf16.mxu0 0
  %1263 = vmatpush1.bf16.msra.mxu0 0
  %1264 = vmatprep.subr.bf16.mxu0 0
  %1265 = vmatpush1.bf16.msra.mxu0 0
  %1266 = vmatprep.subr.bf16.mxu0 0
  %1267 = vmatpush1.bf16.msra.mxu0 0
  %1268 = vmatprep.subr.bf16.mxu0 0
  %1269 = vmatpush1.bf16.msra.mxu0 %v1254
  %1270 = vmatprep.subr.bf16.mxu0 0
  %1271 = vmatpush1.bf16.msra.mxu0 %v1247
  %1272 = vmatprep.subr.bf16.mxu0 0
  %1273 = vmatpush2.bf16.msra.mxu0 0
  %1274 = vmatprep.subr.bf16.mxu0 0
  %1275 = vmatpush2.bf16.msra.mxu0 0
  %1276 = vmatprep.subr.bf16.mxu0 0
  %1277 = vmatpush2.bf16.msra.mxu0 0
  %1278 = vmatprep.subr.bf16.mxu0 0
  %1279 = vmatpush2.bf16.msra.mxu0 0
  %1280 = vmatprep.subr.bf16.mxu0 0
  %1281 = vmatpush2.bf16.msra.mxu0 0
  %1282 = vmatprep.subr.bf16.mxu0 0
  %1283 = vmatpush2.bf16.msra.mxu0 0
  %1284 = vmatprep.subr.bf16.mxu0 0
  %1285 = vmatpush2.bf16.msra.mxu0 0
  %1286 = vmatprep.subr.bf16.mxu0 0
  %1287 = vmatpush2.bf16.msra.mxu0 0
  %1288 = vmatprep.mubr.bf16.mxu0 0
  %1289 = vmatmul.mubr.bf16.gmra.mxu0 %v1251
  %v1290 = vpop.f32.mrf.mxu0
  %v1291 = vadd.f32 %v1240, %v1290
  %v1292 = vpop.f32.mrf.mxu0
  %v1293 = vpop.f32.mrf.mxu0
  %v1294 = vadd.f32 %v1240, %v1293
  %v1295 = vpop.f32.mrf.mxu0
  %1296 = vdwg.mxu0
  %v1297 = vmax.f32 %v1291, 0.0
  %v1298 = vmax.f32 %v1294, 0.0
  %v1299 = vpack.c.bf16 %v1298, %v1297
  %v1300 = vld [vmem:[%s11] sm:$0xf]
  %v1301 = vld [vmem:[%s11 + $0x4] sm:$0xf]
  %v1302 = vlaneseq
  %v1303 = vshrl.u32 %v1302, 7
  %v1304 = vsub.s32 5, %v1303
  %v1305 = vrot.slane %v605, %v1304
  %v1308 = vunpack.c.l.b16 %v1300
  %v1309 = vunpack.c.l.b16 %v1301
  %v1310 = vpack.c.b16 %v1309, %v1308
  %vm1312 = vcmask 130048
  %v1314 = vsel %vm1312, %v1299, 0
  %1316 = vmatprep.subr.bf16.mxu0 0
  %1317 = vmatpush1.bf16.msra.mxu0 0
  %1318 = vmatprep.subr.bf16.mxu0 0
  %1319 = vmatpush1.bf16.msra.mxu0 0
  %1320 = vmatprep.subr.bf16.mxu0 0
  %1321 = vmatpush1.bf16.msra.mxu0 0
  %1322 = vmatprep.subr.bf16.mxu0 0
  %1323 = vmatpush1.bf16.msra.mxu0 0
  %1324 = vmatprep.subr.bf16.mxu0 0
  %1325 = vmatpush1.bf16.msra.mxu0 0
  %1326 = vmatprep.subr.bf16.mxu0 0
  %1327 = vmatpush1.bf16.msra.mxu0 0
  %1328 = vmatprep.subr.bf16.mxu0 0
  %1329 = vmatpush1.bf16.msra.mxu0 0
  %1330 = vmatprep.subr.bf16.mxu0 0
  %1331 = vmatpush1.bf16.msra.mxu0 %v1310
  %1332 = vmatprep.subr.bf16.mxu0 0
  %1333 = vmatpush2.bf16.msra.mxu0 0
  %1334 = vmatprep.subr.bf16.mxu0 0
  %1335 = vmatpush2.bf16.msra.mxu0 0
  %1336 = vmatprep.subr.bf16.mxu0 0
  %1337 = vmatpush2.bf16.msra.mxu0 0
  %1338 = vmatprep.subr.bf16.mxu0 0
  %1339 = vmatpush2.bf16.msra.mxu0 0
  %1340 = vmatprep.subr.bf16.mxu0 0
  %1341 = vmatpush2.bf16.msra.mxu0 0
  %1342 = vmatprep.subr.bf16.mxu0 0
  %1343 = vmatpush2.bf16.msra.mxu0 0
  %1344 = vmatprep.subr.bf16.mxu0 0
  %1345 = vmatpush2.bf16.msra.mxu0 0
  %1346 = vmatprep.subr.bf16.mxu0 0
  %1347 = vmatpush2.bf16.msra.mxu0 0
  %1348 = vmatprep.mubr.bf16.mxu0 0
  %1349 = vmatmul.mubr.bf16.gmra.mxu0 %v1314
  %v1350 = vpop.f32.mrf.mxu0
  %v1351 = vadd.f32 %v1305, %v1350
  %v1352 = vpop.f32.mrf.mxu0
  %v1353 = vpop.f32.mrf.mxu0
  %v1354 = vadd.f32 %v1305, %v1353
  %v1355 = vpop.f32.mrf.mxu0
  %1356 = vdwg.mxu0
  %v1357 = vadd.f32 %v1231, %v1351
  %v1358 = vadd.f32 %v1232, %v1354
  %v1359 = vsel %vm623, %v1357, 0.0
  %1360 = vadd.xlane.f32.xlu0 %v1359
  %v1361 = vpop.xlane.xlu0 %1360
  %v1362 = vsel %vm623, %v1358, 0.0
  %1363 = vadd.xlane.f32.xlu0 %v1362
  %v1364 = vpop.xlane.xlu0 %1363
  %v1365 = vmul.f32 %v1361, %v1196
  %v1366 = vmul.f32 %v1364, %v1196
  %v1367 = vmul.f32 %v1357, %v1357
  %v1368 = vmul.f32 %v1358, %v1358
  %v1369 = vsel %vm623, %v1367, 0.0
  %1370 = vadd.xlane.f32.xlu0 %v1369
  %v1371 = vpop.xlane.xlu0 %1370
  %v1372 = vsel %vm623, %v1368, 0.0
  %1373 = vadd.xlane.f32.xlu0 %v1372
  %v1374 = vpop.xlane.xlu0 %1373
  %v1375 = vmul.f32 %v1371, %v1196
  %v1376 = vmul.f32 %v1374, %v1196
  %v1377 = vsub.f32 %v1357, %v1365
  %v1378 = vsub.f32 %v1358, %v1366
  %v1379 = vmul.f32 %v1365, %v1365
  %v1380 = vmul.f32 %v1366, %v1366
  %v1381 = vsub.f32 %v1375, %v1379
  %v1382 = vsub.f32 %v1376, %v1380
  %v1383 = vadd.f32 %v1381, 1e-05
  %v1384 = vadd.f32 %v1382, 1e-05
  %v1385 = vrsqrt.pop %v1383
  %v1386 = vrsqrt.pop %v1384
  %v1387 = vmul.f32 %v1377, %v1385
  %v1388 = vmul.f32 %v1378, %v1386
  %v1389 = vlaneseq
  %v1390 = vshrl.u32 %v1389, 7
  %v1391 = vsub.s32 6, %v1390
  %v1392 = vrot.slane %v605, %v1391
  %v1393 = vmul.f32 %v1387, %v1392
  %v1394 = vmul.f32 %v1388, %v1392
  %v1395 = vlaneseq
  %v1396 = vshrl.u32 %v1395, 7
  %v1397 = vsub.s32 7, %v1396
  %v1398 = vrot.slane %v605, %v1397
  %v1399 = vadd.f32 %v1393, %v1398
  %v1400 = vadd.f32 %v1394, %v1398
  %s1401 = scalar_lea.vmem %s12, 8
  %v1402 = vld [vmem:[%s1401] sm:$0xff]
  %v1403 = vpack.c.bf16 %v1400, %v1399
  %s1404 = scalar_lea.vmem %s8, 12
  %v1405 = vld [vmem:[%s1404] sm:$0xf]
  %v1406 = vld [vmem:[%s1404 + $0x4] sm:$0xf]
  %v1407 = vld [vmem:[%s1404 + $0x8] sm:$0xf]
  %v1408 = vlaneseq
  %v1409 = vshrl.u32 %v1408, 7
  %v1410 = vsub.s32 0, %v1409
  %v1411 = vrot.slane %v1402, %v1410
  %v1415 = vunpack.c.l.b16 %v1405
  %v1416 = vunpack.c.l.b16 %v1406
  %v1417 = vunpack.c.l.b16 %v1407
  %v1418 = vpack.c.b16 %v1416, %v1415
  %v1419 = vpack.c.b16 %v1417, %v1417
  %v1422 = vsel %vm623, %v1403, 0
  %v1425 = vsel %vm627, %v1419, 0
  %1427 = vmatprep.subr.bf16.mxu0 0
  %1428 = vmatpush1.bf16.msra.mxu0 0
  %1429 = vmatprep.subr.bf16.mxu0 0
  %1430 = vmatpush1.bf16.msra.mxu0 0
  %1431 = vmatprep.subr.bf16.mxu0 0
  %1432 = vmatpush1.bf16.msra.mxu0 0
  %1433 = vmatprep.subr.bf16.mxu0 0
  %1434 = vmatpush1.bf16.msra.mxu0 0
  %1435 = vmatprep.subr.bf16.mxu0 0
  %1436 = vmatpush1.bf16.msra.mxu0 0
  %1437 = vmatprep.subr.bf16.mxu0 0
  %1438 = vmatpush1.bf16.msra.mxu0 0
  %1439 = vmatprep.subr.bf16.mxu0 0
  %1440 = vmatpush1.bf16.msra.mxu0 %v1425
  %1441 = vmatprep.subr.bf16.mxu0 0
  %1442 = vmatpush1.bf16.msra.mxu0 %v1418
  %1443 = vmatprep.subr.bf16.mxu0 0
  %1444 = vmatpush2.bf16.msra.mxu0 0
  %1445 = vmatprep.subr.bf16.mxu0 0
  %1446 = vmatpush2.bf16.msra.mxu0 0
  %1447 = vmatprep.subr.bf16.mxu0 0
  %1448 = vmatpush2.bf16.msra.mxu0 0
  %1449 = vmatprep.subr.bf16.mxu0 0
  %1450 = vmatpush2.bf16.msra.mxu0 0
  %1451 = vmatprep.subr.bf16.mxu0 0
  %1452 = vmatpush2.bf16.msra.mxu0 0
  %1453 = vmatprep.subr.bf16.mxu0 0
  %1454 = vmatpush2.bf16.msra.mxu0 0
  %1455 = vmatprep.subr.bf16.mxu0 0
  %1456 = vmatpush2.bf16.msra.mxu0 0
  %1457 = vmatprep.subr.bf16.mxu0 0
  %1458 = vmatpush2.bf16.msra.mxu0 0
  %1459 = vmatprep.mubr.bf16.mxu0 0
  %1460 = vmatmul.mubr.bf16.gmra.mxu0 %v1422
  %v1461 = vpop.f32.mrf.mxu0
  %v1462 = vadd.f32 %v1411, %v1461
  %v1463 = vpop.f32.mrf.mxu0
  %v1464 = vpop.f32.mrf.mxu0
  %v1465 = vadd.f32 %v1411, %v1464
  %v1466 = vpop.f32.mrf.mxu0
  %1467 = vdwg.mxu0
  %v1468 = vpack.c.bf16 %v1462, %v1462
  %v1469 = vpack.c.bf16 %v1465, %v1465
  %1471 = vrot.lane.b32.xlu0 %v1468, 104
  %v1472 = vpop.permute.xlu0 %1471
  %v1474 = vsel %vm677, %v1468, 0
  %v1477 = vsel %vm677, %v1472, 0
  %1479 = vmatprep.subr.bf16.mxu0 0
  %1480 = vmatpush1.bf16.xpose.msra.mxu0 0
  %1481 = vmatprep.subr.bf16.mxu0 0
  %1482 = vmatpush1.bf16.xpose.msra.mxu0 0
  %1483 = vmatprep.subr.bf16.mxu0 0
  %1484 = vmatpush1.bf16.xpose.msra.mxu0 0
  %1485 = vmatprep.subr.bf16.mxu0 0
  %1486 = vmatpush1.bf16.xpose.msra.mxu0 0
  %1487 = vmatprep.subr.bf16.mxu0 0
  %1488 = vmatpush1.bf16.xpose.msra.mxu0 0
  %1489 = vmatprep.subr.bf16.mxu0 0
  %1490 = vmatpush1.bf16.xpose.msra.mxu0 0
  %1491 = vmatprep.subr.bf16.mxu0 0
  %1492 = vmatpush1.bf16.xpose.msra.mxu0 0
  %1493 = vmatprep.subr.bf16.mxu0 0
  %1494 = vmatpush1.bf16.xpose.msra.mxu0 %v1477
  %1495 = vmatprep.subr.bf16.mxu0 0
  %1496 = vmatpush2.bf16.xpose.msra.mxu0 0
  %1497 = vmatprep.subr.bf16.mxu0 0
  %1498 = vmatpush2.bf16.xpose.msra.mxu0 0
  %1499 = vmatprep.subr.bf16.mxu0 0
  %1500 = vmatpush2.bf16.xpose.msra.mxu0 0
  %1501 = vmatprep.subr.bf16.mxu0 0
  %1502 = vmatpush2.bf16.xpose.msra.mxu0 0
  %1503 = vmatprep.subr.bf16.mxu0 0
  %1504 = vmatpush2.bf16.xpose.msra.mxu0 0
  %1505 = vmatprep.subr.bf16.mxu0 0
  %1506 = vmatpush2.bf16.xpose.msra.mxu0 0
  %1507 = vmatprep.subr.bf16.mxu0 0
  %1508 = vmatpush2.bf16.xpose.msra.mxu0 0
  %1509 = vmatprep.subr.bf16.mxu0 0
  %1510 = vmatpush2.bf16.xpose.msra.mxu0 0
  %1511 = vmatprep.mubr.bf16.mxu0 0
  %1512 = vmatmul.mubr.bf16.gmra.mxu0 %v1474
  %v1513 = vpop.f32.mrf.mxu0
  %v1514 = vadd.f32 %v594, %v1513
  %v1515 = vpop.f32.mrf.mxu0
  %v1516 = vpop.f32.mrf.mxu0
  %v1517 = vpop.f32.mrf.mxu0
  %1518 = vdwg.mxu0
  %1520 = vrot.lane.b32.xlu0 %v1469, 104
  %v1521 = vpop.permute.xlu0 %1520
  %v1523 = vsel %vm677, %v1469, 0
  %v1526 = vsel %vm677, %v1521, 0
  %1528 = vmatprep.subr.bf16.mxu0 0
  %1529 = vmatpush1.bf16.xpose.msra.mxu0 0
  %1530 = vmatprep.subr.bf16.mxu0 0
  %1531 = vmatpush1.bf16.xpose.msra.mxu0 0
  %1532 = vmatprep.subr.bf16.mxu0 0
  %1533 = vmatpush1.bf16.xpose.msra.mxu0 0
  %1534 = vmatprep.subr.bf16.mxu0 0
  %1535 = vmatpush1.bf16.xpose.msra.mxu0 0
  %1536 = vmatprep.subr.bf16.mxu0 0
  %1537 = vmatpush1.bf16.xpose.msra.mxu0 0
  %1538 = vmatprep.subr.bf16.mxu0 0
  %1539 = vmatpush1.bf16.xpose.msra.mxu0 0
  %1540 = vmatprep.subr.bf16.mxu0 0
  %1541 = vmatpush1.bf16.xpose.msra.mxu0 0
  %1542 = vmatprep.subr.bf16.mxu0 0
  %1543 = vmatpush1.bf16.xpose.msra.mxu0 %v1526
  %1544 = vmatprep.subr.bf16.mxu0 0
  %1545 = vmatpush2.bf16.xpose.msra.mxu0 0
  %1546 = vmatprep.subr.bf16.mxu0 0
  %1547 = vmatpush2.bf16.xpose.msra.mxu0 0
  %1548 = vmatprep.subr.bf16.mxu0 0
  %1549 = vmatpush2.bf16.xpose.msra.mxu0 0
  %1550 = vmatprep.subr.bf16.mxu0 0
  %1551 = vmatpush2.bf16.xpose.msra.mxu0 0
  %1552 = vmatprep.subr.bf16.mxu0 0
  %1553 = vmatpush2.bf16.xpose.msra.mxu0 0
  %1554 = vmatprep.subr.bf16.mxu0 0
  %1555 = vmatpush2.bf16.xpose.msra.mxu0 0
  %1556 = vmatprep.subr.bf16.mxu0 0
  %1557 = vmatpush2.bf16.xpose.msra.mxu0 0
  %1558 = vmatprep.subr.bf16.mxu0 0
  %1559 = vmatpush2.bf16.xpose.msra.mxu0 0
  %1560 = vmatprep.mubr.bf16.mxu0 0
  %1561 = vmatmul.mubr.bf16.gmra.mxu0 %v1523
  %v1562 = vpop.f32.mrf.mxu0
  %v1563 = vadd.f32 %v595, %v1562
  %v1564 = vpop.f32.mrf.mxu0
  %v1565 = vpop.f32.mrf.mxu0
  %v1566 = vpop.f32.mrf.mxu0
  %1567 = vdwg.mxu0
  %v1568 = vsel %vm773, %v1514, -inf
  %1569 = vmax.xlane.f32.xlu0 %v1568
  %v1570 = vpop.xlane.xlu0 %1569
  %v1571 = vsel %vm773, %v1563, -inf
  %1572 = vmax.xlane.f32.xlu0 %v1571
  %v1573 = vpop.xlane.xlu0 %1572
  %v1574 = vsub.f32 %v1514, %v1570
  %v1575 = vsub.f32 %v1563, %v1573
  %v1576 = vmul.f32 %v1574, 1.442695
  %v1577 = vpow.pop %v1576
  %v1578 = vmul.f32 %v1575, 1.442695
  %v1579 = vpow.pop %v1578
  %v1580 = vsel %vm773, %v1577, 0.0
  %1581 = vadd.xlane.f32.xlu0 %v1580
  %v1582 = vpop.xlane.xlu0 %1581
  %v1583 = vsel %vm773, %v1579, 0.0
  %1584 = vadd.xlane.f32.xlu0 %v1583
  %v1585 = vpop.xlane.xlu0 %1584
  %v1586 = vrcp.pop %v1582
  %v1587 = vrcp.pop %v1585
  %v1588 = vmul.f32 %v1577, %v1586
  %v1589 = vmul.f32 %v1579, %v1587
  %v1590 = vpack.c.bf16 %v1588, %v1588
  %v1591 = vpack.c.bf16 %v1589, %v1589
  %1592 = vrot.lane.b32.xlu0 %v1468, 80
  %v1593 = vpop.permute.xlu0 %1592
  %v1595 = vsel %vm773, %v1590, 0
  %v1598 = vsel %vm627, %v1593, 0
  %1600 = vmatprep.subr.bf16.mxu0 0
  %1601 = vmatpush1.bf16.msra.mxu0 0
  %1602 = vmatprep.subr.bf16.mxu0 0
  %1603 = vmatpush1.bf16.msra.mxu0 0
  %1604 = vmatprep.subr.bf16.mxu0 0
  %1605 = vmatpush1.bf16.msra.mxu0 0
  %1606 = vmatprep.subr.bf16.mxu0 0
  %1607 = vmatpush1.bf16.msra.mxu0 0
  %1608 = vmatprep.subr.bf16.mxu0 0
  %1609 = vmatpush1.bf16.msra.mxu0 0
  %1610 = vmatprep.subr.bf16.mxu0 0
  %1611 = vmatpush1.bf16.msra.mxu0 0
  %1612 = vmatprep.subr.bf16.mxu0 0
  %1613 = vmatpush1.bf16.msra.mxu0 0
  %1614 = vmatprep.subr.bf16.mxu0 0
  %1615 = vmatpush1.bf16.msra.mxu0 %v1598
  %1616 = vmatprep.subr.bf16.mxu0 0
  %1617 = vmatpush2.bf16.msra.mxu0 0
  %1618 = vmatprep.subr.bf16.mxu0 0
  %1619 = vmatpush2.bf16.msra.mxu0 0
  %1620 = vmatprep.subr.bf16.mxu0 0
  %1621 = vmatpush2.bf16.msra.mxu0 0
  %1622 = vmatprep.subr.bf16.mxu0 0
  %1623 = vmatpush2.bf16.msra.mxu0 0
  %1624 = vmatprep.subr.bf16.mxu0 0
  %1625 = vmatpush2.bf16.msra.mxu0 0
  %1626 = vmatprep.subr.bf16.mxu0 0
  %1627 = vmatpush2.bf16.msra.mxu0 0
  %1628 = vmatprep.subr.bf16.mxu0 0
  %1629 = vmatpush2.bf16.msra.mxu0 0
  %1630 = vmatprep.subr.bf16.mxu0 0
  %1631 = vmatpush2.bf16.msra.mxu0 0
  %1632 = vmatprep.mubr.bf16.mxu0 0
  %1633 = vmatmul.mubr.bf16.gmra.mxu0 %v1595
  %v1634 = vpop.f32.mrf.mxu0
  %v1635 = vadd.f32 0.0, %v1634
  %v1636 = vpop.f32.mrf.mxu0
  %v1637 = vpop.f32.mrf.mxu0
  %v1638 = vpop.f32.mrf.mxu0
  %1639 = vdwg.mxu0
  %1640 = vrot.lane.b32.xlu0 %v1469, 80
  %v1641 = vpop.permute.xlu0 %1640
  %v1643 = vsel %vm773, %v1591, 0
  %v1646 = vsel %vm627, %v1641, 0
  %1648 = vmatprep.subr.bf16.mxu0 0
  %1649 = vmatpush1.bf16.msra.mxu0 0
  %1650 = vmatprep.subr.bf16.mxu0 0
  %1651 = vmatpush1.bf16.msra.mxu0 0
  %1652 = vmatprep.subr.bf16.mxu0 0
  %1653 = vmatpush1.bf16.msra.mxu0 0
  %1654 = vmatprep.subr.bf16.mxu0 0
  %1655 = vmatpush1.bf16.msra.mxu0 0
  %1656 = vmatprep.subr.bf16.mxu0 0
  %1657 = vmatpush1.bf16.msra.mxu0 0
  %1658 = vmatprep.subr.bf16.mxu0 0
  %1659 = vmatpush1.bf16.msra.mxu0 0
  %1660 = vmatprep.subr.bf16.mxu0 0
  %1661 = vmatpush1.bf16.msra.mxu0 0
  %1662 = vmatprep.subr.bf16.mxu0 0
  %1663 = vmatpush1.bf16.msra.mxu0 %v1646
  %1664 = vmatprep.subr.bf16.mxu0 0
  %1665 = vmatpush2.bf16.msra.mxu0 0
  %1666 = vmatprep.subr.bf16.mxu0 0
  %1667 = vmatpush2.bf16.msra.mxu0 0
  %1668 = vmatprep.subr.bf16.mxu0 0
  %1669 = vmatpush2.bf16.msra.mxu0 0
  %1670 = vmatprep.subr.bf16.mxu0 0
  %1671 = vmatpush2.bf16.msra.mxu0 0
  %1672 = vmatprep.subr.bf16.mxu0 0
  %1673 = vmatpush2.bf16.msra.mxu0 0
  %1674 = vmatprep.subr.bf16.mxu0 0
  %1675 = vmatpush2.bf16.msra.mxu0 0
  %1676 = vmatprep.subr.bf16.mxu0 0
  %1677 = vmatpush2.bf16.msra.mxu0 0
  %1678 = vmatprep.subr.bf16.mxu0 0
  %1679 = vmatpush2.bf16.msra.mxu0 0
  %1680 = vmatprep.mubr.bf16.mxu0 0
  %1681 = vmatmul.mubr.bf16.gmra.mxu0 %v1643
  %v1682 = vpop.f32.mrf.mxu0
  %v1683 = vadd.f32 0.0, %v1682
  %v1684 = vpop.f32.mrf.mxu0
  %v1685 = vpop.f32.mrf.mxu0
  %v1686 = vpop.f32.mrf.mxu0
  %1687 = vdwg.mxu0
  %1688 = vrot.lane.b32.xlu0 %v1468, 116
  %v1689 = vpop.permute.xlu0 %1688
  %1690 = vrot.lane.b32.xlu0 %v1468, 92
  %v1691 = vpop.permute.xlu0 %1690
  %v1693 = vsel %vm677, %v1689, 0
  %v1696 = vsel %vm677, %v1691, 0
  %1698 = vmatprep.subr.bf16.mxu0 0
  %1699 = vmatpush1.bf16.xpose.msra.mxu0 0
  %1700 = vmatprep.subr.bf16.mxu0 0
  %1701 = vmatpush1.bf16.xpose.msra.mxu0 0
  %1702 = vmatprep.subr.bf16.mxu0 0
  %1703 = vmatpush1.bf16.xpose.msra.mxu0 0
  %1704 = vmatprep.subr.bf16.mxu0 0
  %1705 = vmatpush1.bf16.xpose.msra.mxu0 0
  %1706 = vmatprep.subr.bf16.mxu0 0
  %1707 = vmatpush1.bf16.xpose.msra.mxu0 0
  %1708 = vmatprep.subr.bf16.mxu0 0
  %1709 = vmatpush1.bf16.xpose.msra.mxu0 0
  %1710 = vmatprep.subr.bf16.mxu0 0
  %1711 = vmatpush1.bf16.xpose.msra.mxu0 0
  %1712 = vmatprep.subr.bf16.mxu0 0
  %1713 = vmatpush1.bf16.xpose.msra.mxu0 %v1696
  %1714 = vmatprep.subr.bf16.mxu0 0
  %1715 = vmatpush2.bf16.xpose.msra.mxu0 0
  %1716 = vmatprep.subr.bf16.mxu0 0
  %1717 = vmatpush2.bf16.xpose.msra.mxu0 0
  %1718 = vmatprep.subr.bf16.mxu0 0
  %1719 = vmatpush2.bf16.xpose.msra.mxu0 0
  %1720 = vmatprep.subr.bf16.mxu0 0
  %1721 = vmatpush2.bf16.xpose.msra.mxu0 0
  %1722 = vmatprep.subr.bf16.mxu0 0
  %1723 = vmatpush2.bf16.xpose.msra.mxu0 0
  %1724 = vmatprep.subr.bf16.mxu0 0
  %1725 = vmatpush2.bf16.xpose.msra.mxu0 0
  %1726 = vmatprep.subr.bf16.mxu0 0
  %1727 = vmatpush2.bf16.xpose.msra.mxu0 0
  %1728 = vmatprep.subr.bf16.mxu0 0
  %1729 = vmatpush2.bf16.xpose.msra.mxu0 0
  %1730 = vmatprep.mubr.bf16.mxu0 0
  %1731 = vmatmul.mubr.bf16.gmra.mxu0 %v1693
  %v1732 = vpop.f32.mrf.mxu0
  %v1733 = vadd.f32 %v594, %v1732
  %v1734 = vpop.f32.mrf.mxu0
  %v1735 = vpop.f32.mrf.mxu0
  %v1736 = vpop.f32.mrf.mxu0
  %1737 = vdwg.mxu0
  %1738 = vrot.lane.b32.xlu0 %v1469, 116
  %v1739 = vpop.permute.xlu0 %1738
  %1740 = vrot.lane.b32.xlu0 %v1469, 92
  %v1741 = vpop.permute.xlu0 %1740
  %v1743 = vsel %vm677, %v1739, 0
  %v1746 = vsel %vm677, %v1741, 0
  %1748 = vmatprep.subr.bf16.mxu0 0
  %1749 = vmatpush1.bf16.xpose.msra.mxu0 0
  %1750 = vmatprep.subr.bf16.mxu0 0
  %1751 = vmatpush1.bf16.xpose.msra.mxu0 0
  %1752 = vmatprep.subr.bf16.mxu0 0
  %1753 = vmatpush1.bf16.xpose.msra.mxu0 0
  %1754 = vmatprep.subr.bf16.mxu0 0
  %1755 = vmatpush1.bf16.xpose.msra.mxu0 0
  %1756 = vmatprep.subr.bf16.mxu0 0
  %1757 = vmatpush1.bf16.xpose.msra.mxu0 0
  %1758 = vmatprep.subr.bf16.mxu0 0
  %1759 = vmatpush1.bf16.xpose.msra.mxu0 0
  %1760 = vmatprep.subr.bf16.mxu0 0
  %1761 = vmatpush1.bf16.xpose.msra.mxu0 0
  %1762 = vmatprep.subr.bf16.mxu0 0
  %1763 = vmatpush1.bf16.xpose.msra.mxu0 %v1746
  %1764 = vmatprep.subr.bf16.mxu0 0
  %1765 = vmatpush2.bf16.xpose.msra.mxu0 0
  %1766 = vmatprep.subr.bf16.mxu0 0
  %1767 = vmatpush2.bf16.xpose.msra.mxu0 0
  %1768 = vmatprep.subr.bf16.mxu0 0
  %1769 = vmatpush2.bf16.xpose.msra.mxu0 0
  %1770 = vmatprep.subr.bf16.mxu0 0
  %1771 = vmatpush2.bf16.xpose.msra.mxu0 0
  %1772 = vmatprep.subr.bf16.mxu0 0
  %1773 = vmatpush2.bf16.xpose.msra.mxu0 0
  %1774 = vmatprep.subr.bf16.mxu0 0
  %1775 = vmatpush2.bf16.xpose.msra.mxu0 0
  %1776 = vmatprep.subr.bf16.mxu0 0
  %1777 = vmatpush2.bf16.xpose.msra.mxu0 0
  %1778 = vmatprep.subr.bf16.mxu0 0
  %1779 = vmatpush2.bf16.xpose.msra.mxu0 0
  %1780 = vmatprep.mubr.bf16.mxu0 0
  %1781 = vmatmul.mubr.bf16.gmra.mxu0 %v1743
  %v1782 = vpop.f32.mrf.mxu0
  %v1783 = vadd.f32 %v595, %v1782
  %v1784 = vpop.f32.mrf.mxu0
  %v1785 = vpop.f32.mrf.mxu0
  %v1786 = vpop.f32.mrf.mxu0
  %1787 = vdwg.mxu0
  %v1788 = vsel %vm773, %v1733, -inf
  %1789 = vmax.xlane.f32.xlu0 %v1788
  %v1790 = vpop.xlane.xlu0 %1789
  %v1791 = vsel %vm773, %v1783, -inf
  %1792 = vmax.xlane.f32.xlu0 %v1791
  %v1793 = vpop.xlane.xlu0 %1792
  %v1794 = vsub.f32 %v1733, %v1790
  %v1795 = vsub.f32 %v1783, %v1793
  %v1796 = vmul.f32 %v1794, 1.442695
  %v1797 = vpow.pop %v1796
  %v1798 = vmul.f32 %v1795, 1.442695
  %v1799 = vpow.pop %v1798
  %v1800 = vsel %vm773, %v1797, 0.0
  %1801 = vadd.xlane.f32.xlu0 %v1800
  %v1802 = vpop.xlane.xlu0 %1801
  %v1803 = vsel %vm773, %v1799, 0.0
  %1804 = vadd.xlane.f32.xlu0 %v1803
  %v1805 = vpop.xlane.xlu0 %1804
  %v1806 = vrcp.pop %v1802
  %v1807 = vrcp.pop %v1805
  %v1808 = vmul.f32 %v1797, %v1806
  %v1809 = vmul.f32 %v1799, %v1807
  %v1810 = vpack.c.bf16 %v1808, %v1808
  %v1811 = vpack.c.bf16 %v1809, %v1809
  %1812 = vrot.lane.b32.xlu0 %v1468, 68
  %v1813 = vpop.permute.xlu0 %1812
  %v1815 = vsel %vm773, %v1810, 0
  %v1818 = vsel %vm627, %v1813, 0
  %1820 = vmatprep.subr.bf16.mxu0 0
  %1821 = vmatpush1.bf16.msra.mxu0 0
  %1822 = vmatprep.subr.bf16.mxu0 0
  %1823 = vmatpush1.bf16.msra.mxu0 0
  %1824 = vmatprep.subr.bf16.mxu0 0
  %1825 = vmatpush1.bf16.msra.mxu0 0
  %1826 = vmatprep.subr.bf16.mxu0 0
  %1827 = vmatpush1.bf16.msra.mxu0 0
  %1828 = vmatprep.subr.bf16.mxu0 0
  %1829 = vmatpush1.bf16.msra.mxu0 0
  %1830 = vmatprep.subr.bf16.mxu0 0
  %1831 = vmatpush1.bf16.msra.mxu0 0
  %1832 = vmatprep.subr.bf16.mxu0 0
  %1833 = vmatpush1.bf16.msra.mxu0 0
  %1834 = vmatprep.subr.bf16.mxu0 0
  %1835 = vmatpush1.bf16.msra.mxu0 %v1818
  %1836 = vmatprep.subr.bf16.mxu0 0
  %1837 = vmatpush2.bf16.msra.mxu0 0
  %1838 = vmatprep.subr.bf16.mxu0 0
  %1839 = vmatpush2.bf16.msra.mxu0 0
  %1840 = vmatprep.subr.bf16.mxu0 0
  %1841 = vmatpush2.bf16.msra.mxu0 0
  %1842 = vmatprep.subr.bf16.mxu0 0
  %1843 = vmatpush2.bf16.msra.mxu0 0
  %1844 = vmatprep.subr.bf16.mxu0 0
  %1845 = vmatpush2.bf16.msra.mxu0 0
  %1846 = vmatprep.subr.bf16.mxu0 0
  %1847 = vmatpush2.bf16.msra.mxu0 0
  %1848 = vmatprep.subr.bf16.mxu0 0
  %1849 = vmatpush2.bf16.msra.mxu0 0
  %1850 = vmatprep.subr.bf16.mxu0 0
  %1851 = vmatpush2.bf16.msra.mxu0 0
  %1852 = vmatprep.mubr.bf16.mxu0 0
  %1853 = vmatmul.mubr.bf16.gmra.mxu0 %v1815
  %v1854 = vpop.f32.mrf.mxu0
  %v1855 = vadd.f32 0.0, %v1854
  %v1856 = vpop.f32.mrf.mxu0
  %v1857 = vpop.f32.mrf.mxu0
  %v1858 = vpop.f32.mrf.mxu0
  %1859 = vdwg.mxu0
  %1860 = vrot.lane.b32.xlu0 %v1469, 68
  %v1861 = vpop.permute.xlu0 %1860
  %v1863 = vsel %vm773, %v1811, 0
  %v1866 = vsel %vm627, %v1861, 0
  %1868 = vmatprep.subr.bf16.mxu0 0
  %1869 = vmatpush1.bf16.msra.mxu0 0
  %1870 = vmatprep.subr.bf16.mxu0 0
  %1871 = vmatpush1.bf16.msra.mxu0 0
  %1872 = vmatprep.subr.bf16.mxu0 0
  %1873 = vmatpush1.bf16.msra.mxu0 0
  %1874 = vmatprep.subr.bf16.mxu0 0
  %1875 = vmatpush1.bf16.msra.mxu0 0
  %1876 = vmatprep.subr.bf16.mxu0 0
  %1877 = vmatpush1.bf16.msra.mxu0 0
  %1878 = vmatprep.subr.bf16.mxu0 0
  %1879 = vmatpush1.bf16.msra.mxu0 0
  %1880 = vmatprep.subr.bf16.mxu0 0
  %1881 = vmatpush1.bf16.msra.mxu0 0
  %1882 = vmatprep.subr.bf16.mxu0 0
  %1883 = vmatpush1.bf16.msra.mxu0 %v1866
  %1884 = vmatprep.subr.bf16.mxu0 0
  %1885 = vmatpush2.bf16.msra.mxu0 0
  %1886 = vmatprep.subr.bf16.mxu0 0
  %1887 = vmatpush2.bf16.msra.mxu0 0
  %1888 = vmatprep.subr.bf16.mxu0 0
  %1889 = vmatpush2.bf16.msra.mxu0 0
  %1890 = vmatprep.subr.bf16.mxu0 0
  %1891 = vmatpush2.bf16.msra.mxu0 0
  %1892 = vmatprep.subr.bf16.mxu0 0
  %1893 = vmatpush2.bf16.msra.mxu0 0
  %1894 = vmatprep.subr.bf16.mxu0 0
  %1895 = vmatpush2.bf16.msra.mxu0 0
  %1896 = vmatprep.subr.bf16.mxu0 0
  %1897 = vmatpush2.bf16.msra.mxu0 0
  %1898 = vmatprep.subr.bf16.mxu0 0
  %1899 = vmatpush2.bf16.msra.mxu0 0
  %1900 = vmatprep.mubr.bf16.mxu0 0
  %1901 = vmatmul.mubr.bf16.gmra.mxu0 %v1863
  %v1902 = vpop.f32.mrf.mxu0
  %v1903 = vadd.f32 0.0, %v1902
  %v1904 = vpop.f32.mrf.mxu0
  %v1905 = vpop.f32.mrf.mxu0
  %v1906 = vpop.f32.mrf.mxu0
  %1907 = vdwg.mxu0
  %1910 = vrot.lane.b32.xlu0 %v1855, 12
  %v1911 = vpop.permute.xlu0 %1910
  %1912 = vrot.lane.b32.xlu0 %v1903, 12
  %v1913 = vpop.permute.xlu0 %1912
  %v1916 = vsel %vm677, %v1635, %v1911
  %v1917 = vsel %vm677, %v1683, %v1913
  %v1918 = vpack.c.bf16 %v1917, %v1916
  %s1919 = scalar_lea.vmem %s9, 12
  %v1920 = vld [vmem:[%s1919] sm:$0xf]
  %v1921 = vld [vmem:[%s1919 + $0x4] sm:$0xf]
  %v1922 = vld [vmem:[%s1919 + $0x8] sm:$0xf]
  %v1923 = vlaneseq
  %v1924 = vshrl.u32 %v1923, 7
  %v1925 = vsub.s32 1, %v1924
  %v1926 = vrot.slane %v1402, %v1925
  %v1930 = vunpack.c.l.b16 %v1920
  %v1931 = vunpack.c.l.b16 %v1921
  %v1932 = vunpack.c.l.b16 %v1922
  %v1933 = vpack.c.b16 %v1931, %v1930
  %v1934 = vpack.c.b16 %v1932, %v1932
  %v1937 = vsel %vm623, %v1918, 0
  %v1940 = vsel %vm627, %v1934, 0
  %1942 = vmatprep.subr.bf16.mxu0 0
  %1943 = vmatpush1.bf16.msra.mxu0 0
  %1944 = vmatprep.subr.bf16.mxu0 0
  %1945 = vmatpush1.bf16.msra.mxu0 0
  %1946 = vmatprep.subr.bf16.mxu0 0
  %1947 = vmatpush1.bf16.msra.mxu0 0
  %1948 = vmatprep.subr.bf16.mxu0 0
  %1949 = vmatpush1.bf16.msra.mxu0 0
  %1950 = vmatprep.subr.bf16.mxu0 0
  %1951 = vmatpush1.bf16.msra.mxu0 0
  %1952 = vmatprep.subr.bf16.mxu0 0
  %1953 = vmatpush1.bf16.msra.mxu0 0
  %1954 = vmatprep.subr.bf16.mxu0 0
  %1955 = vmatpush1.bf16.msra.mxu0 %v1940
  %1956 = vmatprep.subr.bf16.mxu0 0
  %1957 = vmatpush1.bf16.msra.mxu0 %v1933
  %1958 = vmatprep.subr.bf16.mxu0 0
  %1959 = vmatpush2.bf16.msra.mxu0 0
  %1960 = vmatprep.subr.bf16.mxu0 0
  %1961 = vmatpush2.bf16.msra.mxu0 0
  %1962 = vmatprep.subr.bf16.mxu0 0
  %1963 = vmatpush2.bf16.msra.mxu0 0
  %1964 = vmatprep.subr.bf16.mxu0 0
  %1965 = vmatpush2.bf16.msra.mxu0 0
  %1966 = vmatprep.subr.bf16.mxu0 0
  %1967 = vmatpush2.bf16.msra.mxu0 0
  %1968 = vmatprep.subr.bf16.mxu0 0
  %1969 = vmatpush2.bf16.msra.mxu0 0
  %1970 = vmatprep.subr.bf16.mxu0 0
  %1971 = vmatpush2.bf16.msra.mxu0 0
  %1972 = vmatprep.subr.bf16.mxu0 0
  %1973 = vmatpush2.bf16.msra.mxu0 0
  %1974 = vmatprep.mubr.bf16.mxu0 0
  %1975 = vmatmul.mubr.bf16.gmra.mxu0 %v1937
  %v1976 = vpop.f32.mrf.mxu0
  %v1977 = vadd.f32 %v1926, %v1976
  %v1978 = vpop.f32.mrf.mxu0
  %v1979 = vpop.f32.mrf.mxu0
  %v1980 = vadd.f32 %v1926, %v1979
  %v1981 = vpop.f32.mrf.mxu0
  %1982 = vdwg.mxu0
  %v1983 = vadd.f32 %v1399, %v1977
  %v1984 = vadd.f32 %v1400, %v1980
  %v1985 = vsel %vm623, %v1983, 0.0
  %1986 = vadd.xlane.f32.xlu0 %v1985
  %v1987 = vpop.xlane.xlu0 %1986
  %v1988 = vsel %vm623, %v1984, 0.0
  %1989 = vadd.xlane.f32.xlu0 %v1988
  %v1990 = vpop.xlane.xlu0 %1989
  %v1991 = vmul.f32 %v1987, %v1196
  %v1992 = vmul.f32 %v1990, %v1196
  %v1993 = vmul.f32 %v1983, %v1983
  %v1994 = vmul.f32 %v1984, %v1984
  %v1995 = vsel %vm623, %v1993, 0.0
  %1996 = vadd.xlane.f32.xlu0 %v1995
  %v1997 = vpop.xlane.xlu0 %1996
  %v1998 = vsel %vm623, %v1994, 0.0
  %1999 = vadd.xlane.f32.xlu0 %v1998
  %v2000 = vpop.xlane.xlu0 %1999
  %v2001 = vmul.f32 %v1997, %v1196
  %v2002 = vmul.f32 %v2000, %v1196
  %v2003 = vsub.f32 %v1983, %v1991
  %v2004 = vsub.f32 %v1984, %v1992
  %v2005 = vmul.f32 %v1991, %v1991
  %v2006 = vmul.f32 %v1992, %v1992
  %v2007 = vsub.f32 %v2001, %v2005
  %v2008 = vsub.f32 %v2002, %v2006
  %v2009 = vadd.f32 %v2007, 1e-05
  %v2010 = vadd.f32 %v2008, 1e-05
  %v2011 = vrsqrt.pop %v2009
  %v2012 = vrsqrt.pop %v2010
  %v2013 = vmul.f32 %v2003, %v2011
  %v2014 = vmul.f32 %v2004, %v2012
  %v2015 = vlaneseq
  %v2016 = vshrl.u32 %v2015, 7
  %v2017 = vsub.s32 2, %v2016
  %v2018 = vrot.slane %v1402, %v2017
  %v2019 = vmul.f32 %v2013, %v2018
  %v2020 = vmul.f32 %v2014, %v2018
  %v2021 = vlaneseq
  %v2022 = vshrl.u32 %v2021, 7
  %v2023 = vsub.s32 3, %v2022
  %v2024 = vrot.slane %v1402, %v2023
  %v2025 = vadd.f32 %v2019, %v2024
  %v2026 = vadd.f32 %v2020, %v2024
  %v2027 = vpack.c.bf16 %v2026, %v2025
  %s2028 = scalar_lea.vmem %s10, 12
  %v2029 = vld [vmem:[%s2028] sm:$0xf]
  %v2030 = vld [vmem:[%s2028 + $0x4] sm:$0xf]
  %v2031 = vld [vmem:[%s2028 + $0x8] sm:$0xf]
  %v2032 = vlaneseq
  %v2033 = vshrl.u32 %v2032, 7
  %v2034 = vsub.s32 4, %v2033
  %v2035 = vrot.slane %v1402, %v2034
  %v2039 = vunpack.c.l.b16 %v2029
  %v2040 = vunpack.c.l.b16 %v2030
  %v2041 = vunpack.c.l.b16 %v2031
  %v2042 = vpack.c.b16 %v2040, %v2039
  %v2043 = vpack.c.b16 %v2041, %v2041
  %v2046 = vsel %vm623, %v2027, 0
  %v2049 = vsel %vm627, %v2043, 0
  %2051 = vmatprep.subr.bf16.mxu0 0
  %2052 = vmatpush1.bf16.msra.mxu0 0
  %2053 = vmatprep.subr.bf16.mxu0 0
  %2054 = vmatpush1.bf16.msra.mxu0 0
  %2055 = vmatprep.subr.bf16.mxu0 0
  %2056 = vmatpush1.bf16.msra.mxu0 0
  %2057 = vmatprep.subr.bf16.mxu0 0
  %2058 = vmatpush1.bf16.msra.mxu0 0
  %2059 = vmatprep.subr.bf16.mxu0 0
  %2060 = vmatpush1.bf16.msra.mxu0 0
  %2061 = vmatprep.subr.bf16.mxu0 0
  %2062 = vmatpush1.bf16.msra.mxu0 0
  %2063 = vmatprep.subr.bf16.mxu0 0
  %2064 = vmatpush1.bf16.msra.mxu0 %v2049
  %2065 = vmatprep.subr.bf16.mxu0 0
  %2066 = vmatpush1.bf16.msra.mxu0 %v2042
  %2067 = vmatprep.subr.bf16.mxu0 0
  %2068 = vmatpush2.bf16.msra.mxu0 0
  %2069 = vmatprep.subr.bf16.mxu0 0
  %2070 = vmatpush2.bf16.msra.mxu0 0
  %2071 = vmatprep.subr.bf16.mxu0 0
  %2072 = vmatpush2.bf16.msra.mxu0 0
  %2073 = vmatprep.subr.bf16.mxu0 0
  %2074 = vmatpush2.bf16.msra.mxu0 0
  %2075 = vmatprep.subr.bf16.mxu0 0
  %2076 = vmatpush2.bf16.msra.mxu0 0
  %2077 = vmatprep.subr.bf16.mxu0 0
  %2078 = vmatpush2.bf16.msra.mxu0 0
  %2079 = vmatprep.subr.bf16.mxu0 0
  %2080 = vmatpush2.bf16.msra.mxu0 0
  %2081 = vmatprep.subr.bf16.mxu0 0
  %2082 = vmatpush2.bf16.msra.mxu0 0
  %2083 = vmatprep.mubr.bf16.mxu0 0
  %2084 = vmatmul.mubr.bf16.gmra.mxu0 %v2046
  %v2085 = vpop.f32.mrf.mxu0
  %v2086 = vadd.f32 %v2035, %v2085
  %v2087 = vpop.f32.mrf.mxu0
  %v2088 = vpop.f32.mrf.mxu0
  %v2089 = vadd.f32 %v2035, %v2088
  %v2090 = vpop.f32.mrf.mxu0
  %2091 = vdwg.mxu0
  %v2092 = vmax.f32 %v2086, 0.0
  %v2093 = vmax.f32 %v2089, 0.0
  %v2094 = vpack.c.bf16 %v2093, %v2092
  %s2095 = scalar_lea.vmem %s11, 8
  %v2096 = vld [vmem:[%s2095] sm:$0xf]
  %v2097 = vld [vmem:[%s2095 + $0x4] sm:$0xf]
  %v2098 = vlaneseq
  %v2099 = vshrl.u32 %v2098, 7
  %v2100 = vsub.s32 5, %v2099
  %v2101 = vrot.slane %v1402, %v2100
  %v2104 = vunpack.c.l.b16 %v2096
  %v2105 = vunpack.c.l.b16 %v2097
  %v2106 = vpack.c.b16 %v2105, %v2104
  %v2109 = vsel %vm1312, %v2094, 0
  %2111 = vmatprep.subr.bf16.mxu0 0
  %2112 = vmatpush1.bf16.msra.mxu0 0
  %2113 = vmatprep.subr.bf16.mxu0 0
  %2114 = vmatpush1.bf16.msra.mxu0 0
  %2115 = vmatprep.subr.bf16.mxu0 0
  %2116 = vmatpush1.bf16.msra.mxu0 0
  %2117 = vmatprep.subr.bf16.mxu0 0
  %2118 = vmatpush1.bf16.msra.mxu0 0
  %2119 = vmatprep.subr.bf16.mxu0 0
  %2120 = vmatpush1.bf16.msra.mxu0 0
  %2121 = vmatprep.subr.bf16.mxu0 0
  %2122 = vmatpush1.bf16.msra.mxu0 0
  %2123 = vmatprep.subr.bf16.mxu0 0
  %2124 = vmatpush1.bf16.msra.mxu0 0
  %2125 = vmatprep.subr.bf16.mxu0 0
  %2126 = vmatpush1.bf16.msra.mxu0 %v2106
  %2127 = vmatprep.subr.bf16.mxu0 0
  %2128 = vmatpush2.bf16.msra.mxu0 0
  %2129 = vmatprep.subr.bf16.mxu0 0
  %2130 = vmatpush2.bf16.msra.mxu0 0
  %2131 = vmatprep.subr.bf16.mxu0 0
  %2132 = vmatpush2.bf16.msra.mxu0 0
  %2133 = vmatprep.subr.bf16.mxu0 0
  %2134 = vmatpush2.bf16.msra.mxu0 0
  %2135 = vmatprep.subr.bf16.mxu0 0
  %2136 = vmatpush2.bf16.msra.mxu0 0
  %2137 = vmatprep.subr.bf16.mxu0 0
  %2138 = vmatpush2.bf16.msra.mxu0 0
  %2139 = vmatprep.subr.bf16.mxu0 0
  %2140 = vmatpush2.bf16.msra.mxu0 0
  %2141 = vmatprep.subr.bf16.mxu0 0
  %2142 = vmatpush2.bf16.msra.mxu0 0
  %2143 = vmatprep.mubr.bf16.mxu0 0
  %2144 = vmatmul.mubr.bf16.gmra.mxu0 %v2109
  %v2145 = vpop.f32.mrf.mxu0
  %v2146 = vadd.f32 %v2101, %v2145
  %v2147 = vpop.f32.mrf.mxu0
  %v2148 = vpop.f32.mrf.mxu0
  %v2149 = vadd.f32 %v2101, %v2148
  %v2150 = vpop.f32.mrf.mxu0
  %2151 = vdwg.mxu0
  %v2152 = vadd.f32 %v2025, %v2146
  %v2153 = vadd.f32 %v2026, %v2149
  %v2154 = vsel %vm623, %v2152, 0.0
  %2155 = vadd.xlane.f32.xlu0 %v2154
  %v2156 = vpop.xlane.xlu0 %2155
  %v2157 = vsel %vm623, %v2153, 0.0
  %2158 = vadd.xlane.f32.xlu0 %v2157
  %v2159 = vpop.xlane.xlu0 %2158
  %v2160 = vmul.f32 %v2156, %v1196
  %v2161 = vmul.f32 %v2159, %v1196
  %v2162 = vmul.f32 %v2152, %v2152
  %v2163 = vmul.f32 %v2153, %v2153
  %v2164 = vsel %vm623, %v2162, 0.0
  %2165 = vadd.xlane.f32.xlu0 %v2164
  %v2166 = vpop.xlane.xlu0 %2165
  %v2167 = vsel %vm623, %v2163, 0.0
  %2168 = vadd.xlane.f32.xlu0 %v2167
  %v2169 = vpop.xlane.xlu0 %2168
  %v2170 = vmul.f32 %v2166, %v1196
  %v2171 = vmul.f32 %v2169, %v1196
  %v2172 = vsub.f32 %v2152, %v2160
  %v2173 = vsub.f32 %v2153, %v2161
  %v2174 = vmul.f32 %v2160, %v2160
  %v2175 = vmul.f32 %v2161, %v2161
  %v2176 = vsub.f32 %v2170, %v2174
  %v2177 = vsub.f32 %v2171, %v2175
  %v2178 = vadd.f32 %v2176, 1e-05
  %v2179 = vadd.f32 %v2177, 1e-05
  %v2180 = vrsqrt.pop %v2178
  %v2181 = vrsqrt.pop %v2179
  %v2182 = vmul.f32 %v2172, %v2180
  %v2183 = vmul.f32 %v2173, %v2181
  %v2184 = vlaneseq
  %v2185 = vshrl.u32 %v2184, 7
  %v2186 = vsub.s32 6, %v2185
  %v2187 = vrot.slane %v1402, %v2186
  %v2188 = vmul.f32 %v2182, %v2187
  %v2189 = vmul.f32 %v2183, %v2187
  %v2190 = vlaneseq
  %v2191 = vshrl.u32 %v2190, 7
  %v2192 = vsub.s32 7, %v2191
  %v2193 = vrot.slane %v1402, %v2192
  %v2194 = vadd.f32 %v2188, %v2193
  %v2195 = vadd.f32 %v2189, %v2193
  %v2196 = vmul.f32 %v2194, %v603
  %v2197 = vmul.f32 %v2195, %v604
  %v2198 = vsel %vm623, %v2196, 0.0
  %v2199 = vrot.slane %v2198, 4
  %v2200 = vadd.f32 %v2198, %v2199
  %v2201 = vrot.slane %v2200, 2
  %v2202 = vadd.f32 %v2200, %v2201
  %v2203 = vrot.slane %v2202, 1
  %v2204 = vadd.f32 %v2202, %v2203
  %v2205 = vsel %vm623, %v2197, 0.0
  %v2206 = vrot.slane %v2205, 4
  %v2207 = vadd.f32 %v2205, %v2206
  %v2208 = vrot.slane %v2207, 2
  %v2209 = vadd.f32 %v2207, %v2208
  %v2210 = vrot.slane %v2209, 1
  %v2211 = vadd.f32 %v2209, %v2210
  %v2212 = vadd.f32 %v551, 1.0
  %2214 = vset.pattern.permute.xlu0 0
  %2215 = vperm.xlu0 %2214, %v2212
  %v2216 = vpop.permute.xlu0 %2215
  %v2217 = vrot.slane %v2216, 1
  %v2220 = vrcp.pop %v2216
  %v2221 = vmul.f32 %v2204, %v2220
  %v2222 = vrcp.pop %v2217
  %v2223 = vmul.f32 %v2211, %v2222
  %v2226 = vrot.slane %v2223, 7
  %vm2227 = vcmask 1041409
  %v2228 = vsel %vm2227, %v2226, %v2221
  %vm2230 = vcmask 189440
  %2231 = vst.msk [vmem:[%s13] sm:$0x3] %vm2230, %v2228
  %v2232 = vld [vmem:[%s2] sm:$0x3]
  %v2233 = vld [vmem:[%s6] sm:$0x7]
  %v2234 = vld [vmem:[%s7] sm:$0x1]
  %v2236 = vlaneseq
  %v2237 = vshrl.u32 %v2236, 7
  %v2238 = vsub.s32 0, %v2237
  %v2239 = vrot.slane %v2234, %v2238
  %v2241 = vadd.f32 %v2239, 0.0
  %2243 = vset.pattern.permute.xlu0 0
  %2244 = vperm.xlu0 %2243, %v2232
  %v2245 = vpop.permute.xlu0 %2244
  %v2247 = vlaneseq
  %v2248 = vshrl.u32 %v2247, 7
  %v2249 = vsub.s32 0, %v2248
  %v2250 = vrot.slane %v2233, %v2249
  %v2251 = vmul.f32 %v2245, %v2250
  %v2252 = vadd.f32 %v2241, %v2251
  %2253 = vset.pattern.permute.xlu0 1
  %2254 = vperm.xlu0 %2253, %v2232
  %v2255 = vpop.permute.xlu0 %2254
  %v2257 = vlaneseq
  %v2258 = vshrl.u32 %v2257, 7
  %v2259 = vsub.s32 1, %v2258
  %v2260 = vrot.slane %v2233, %v2259
  %v2261 = vmul.f32 %v2255, %v2260
  %v2262 = vadd.f32 %v2252, %v2261
  %2263 = vset.pattern.permute.xlu0 2
  %2264 = vperm.xlu0 %2263, %v2232
  %v2265 = vpop.permute.xlu0 %2264
  %v2267 = vlaneseq
  %v2268 = vshrl.u32 %v2267, 7
  %v2269 = vsub.s32 2, %v2268
  %v2270 = vrot.slane %v2233, %v2269
  %v2271 = vmul.f32 %v2265, %v2270
  %v2272 = vadd.f32 %v2262, %v2271
  %vm2273 = vcmask 25600
  %2274 = vst.msk [vmem:[%s14] sm:$0x3] %vm2273, %v2272
  // Predicated region
  $region54: #{raindrop_forward.1} parent=0 // pred_check
    _
  $region55: #{raindrop_forward.1} parent=0 // pred_check_branch
    %2276 = sbr.rel (0) target = $region57
  $region56: #{raindrop_forward.1} parent=0 // pred_region
    _
  $region57: #{raindrop_forward.1} parent=0 // pred_fallthru
    _
  // Predicated region
  $region58: #{raindrop_forward.1} parent=0 // pred_check
    _
  $region59: #{raindrop_forward.1} parent=0 // pred_check_branch
    %2278 = sbr.rel (0) target = $region61
  $region60: #{raindrop_forward.1} parent=0 // pred_region
    _
  $region61: #{raindrop_forward.1} parent=0 // pred_fallthru
    _
  // Predicated region
  $region62: #{raindrop_forward.1} parent=0 // pred_check
    _
  $region63: #{raindrop_forward.1} parent=0 // pred_check_branch
    %2280 = sbr.rel (0) target = $region65
  $region64: #{raindrop_forward.1} parent=0 // pred_region
    _
  $region65: #{raindrop_forward.1} parent=0 // pred_fallthru
    _
  // Predicated region
  $region66: #{raindrop_forward.1} parent=0 // pred_check
    _
  $region67: #{raindrop_forward.1} parent=0 // pred_check_branch
    %2282 = sbr.rel (0) target = $region69
  $region68: #{raindrop_forward.1} parent=0 // pred_region
    _
  $region69: #{raindrop_forward.1} parent=0 // pred_fallthru
    _

</llo_original>
